<compile_context>
chip_gen: v6e
topology: v6e:2x2x1
jax: 0.10.0
libtpu: 0.0.40
codegen_flags: <defaults>
</compile_context>

<pallas_src>
import functools

import jax
import jax.numpy as jnp
from jax.experimental import pallas as pl
from jax.experimental.pallas import tpu as pltpu

LANE = 128
SUBLANE = 8
EDGE_TILE = 128


def _round_up(x, m):
    return (x + m - 1) // m * m


def _full_spec(shape):
    """Whole-array VMEM block, identical for every grid step."""
    ndim = len(shape)
    return pl.BlockSpec(shape, lambda e: (0,) * ndim)


# ----------------------------- fused Pallas kernel ---------------------------

def _fused_kernel(
    movie_x_ref, wlin_ref, blin_ref,   # movie Linear(20 -> Hp) encoder (bf16/f32 bias)
    xuser_ref, memb_ref,               # gathered user / movie embeddings (bf16)
    afwd_ref, dfwd_ref,                # user->movie adjacency counts (bf16) + f32 1/deg
    arev_ref, drev_ref,                # movie->user adjacency counts (bf16) + f32 1/deg
    convw_ref,                         # [8, Hp, Hp] bf16: (wl, wr) x {l1 fwd, l1 rev, l2 fwd, l2 rev}
    convb_ref,                         # [4, 1, Hp] f32 biases in the same conv order
    su_ref, sm_ref,                    # per-tile one-hot edge selectors (bf16)
    o_ref,                             # [EDGE_TILE, 1] f32 predictions for this tile
):
    f32 = jnp.float32
    bf16 = jnp.bfloat16

    # --- encoders: movie = Linear(20->H)(x) + emb ; user = emb ---
    x_movie = (
        jnp.dot(movie_x_ref[...], wlin_ref[...], preferred_element_type=f32)
        + blin_ref[...]
        + memb_ref[...].astype(f32)
    )
    x_user = xuser_ref[...].astype(f32)

    # SAGEConv(aggr='mean', root_weight=True, bias in lin_l):
    #   out = mean_agg(x_src) @ W_l + x_dst @ W_r + b
    # bf16 MXU operands, f32 accumulation; 1/deg applied as a separate f32 scale.
    def sage(a, inv_deg, x_src, x_dst, wl, wr, b, relu):
        agg = jnp.dot(a, x_src.astype(bf16), preferred_element_type=f32) * inv_deg
        out = (jnp.dot(agg.astype(bf16), wl, preferred_element_type=f32)
               + jnp.dot(x_dst.astype(bf16), wr, preferred_element_type=f32)
               + b)
        return jnp.maximum(out, 0.0) if relu else out

    afwd = afwd_ref[...]
    arev = arev_ref[...]
    dfwd = dfwd_ref[...]
    drev = drev_ref[...]

    # hetero layer 1 (+ relu)
    m1 = sage(afwd, dfwd, x_user, x_movie, convw_ref[0], convw_ref[1], convb_ref[0], True)
    u1 = sage(arev, drev, x_movie, x_user, convw_ref[2], convw_ref[3], convb_ref[1], True)
    # hetero layer 2
    m2 = sage(afwd, dfwd, u1, m1, convw_ref[4], convw_ref[5], convb_ref[2], False)
    u2 = sage(arev, drev, m1, u1, convw_ref[6], convw_ref[7], convb_ref[3], False)

    # --- classifier for this label-edge tile: pred[e] = u2[src_e] . m2[dst_e]
    # eu = su @ u2, em = sm @ m2 (one-hot gathers), then a lane reduction.
    # TODO(synk): with many edge tiles, hoist the GNN part into its own call (or a
    # compute-once scratch) instead of recomputing it per tile.
    eu = jnp.dot(su_ref[...], u2.astype(bf16), preferred_element_type=f32)  # [TE, Hp]
    em = jnp.dot(sm_ref[...], m2.astype(bf16), preferred_element_type=f32)  # [TE, Hp]
    o_ref[...] = jnp.sum(eu * em, axis=-1, keepdims=True)                   # [TE, 1]


def fused_forward(movie_x, wlin, blin, x_user, m_emb,
                  a_fwd, d_fwd, a_rev, d_rev, conv_w, conv_b, su, sm):
    e_pad = su.shape[0]
    n_tiles = e_pad // EDGE_TILE
    fixed_args = (movie_x, wlin, blin, x_user, m_emb,
                  a_fwd, d_fwd, a_rev, d_rev, conv_w, conv_b)
    in_specs = [_full_spec(a.shape) for a in fixed_args]
    in_specs += [
        pl.BlockSpec((EDGE_TILE, su.shape[1]), lambda e: (e, 0)),
        pl.BlockSpec((EDGE_TILE, sm.shape[1]), lambda e: (e, 0)),
    ]
    return pl.pallas_call(
        _fused_kernel,
        out_shape=jax.ShapeDtypeStruct((e_pad, 1), jnp.float32),
        grid_spec=pltpu.PrefetchScalarGridSpec(
            num_scalar_prefetch=0,
            grid=(n_tiles,),
            in_specs=in_specs,
            out_specs=pl.BlockSpec((EDGE_TILE, 1), lambda e: (e, 0)),
        ),
        compiler_params=pltpu.CompilerParams(
            dimension_semantics=("parallel",),
            vmem_limit_bytes=32 * 1024 * 1024,
        ),
    )(*fixed_args, su, sm)


# ------------------------------ plain-JAX glue -------------------------------

def build_adjacency(src_idx, dst_idx, num_dst_pad, num_src_pad):
    """Dense count matrix A (bf16, exact small integers) + f32 1/deg column so
    that (A @ x_src) * inv_deg == scatter-mean (isolated nodes -> 0)."""
    a = jnp.zeros((num_dst_pad, num_src_pad), jnp.float32).at[dst_idx, src_idx].add(1.0)
    deg = a.sum(axis=-1, keepdims=True)
    inv_deg = 1.0 / jnp.maximum(deg, 1.0)
    return a.astype(jnp.bfloat16), inv_deg


def _pad2(x, rows, cols):
    return jnp.pad(x, ((0, rows - x.shape[0]), (0, cols - x.shape[1])))


def init_params(key, hidden, num_users, num_movies, movie_feat_dim):
    def nrm(k, shape, scale):
        return (scale * jax.random.normal(k, shape)).astype(jnp.float32)

    keys = jax.random.split(key, 20)
    p = {}
    # movie_lin: Linear(20, H)   (stored transposed: [in, out])
    p["movie_lin_w"] = nrm(keys[0], (movie_feat_dim, hidden), movie_feat_dim ** -0.5)
    p["movie_lin_b"] = nrm(keys[1], (1, hidden), movie_feat_dim ** -0.5)
    # embeddings
    p["user_emb"] = nrm(keys[2], (num_users, hidden), 1.0)
    p["movie_emb"] = nrm(keys[3], (num_movies, hidden), 1.0)
    # hetero SAGEConv params: two layers x two edge types
    # 'fwd'  = ('user','likes','movie')      src=user  -> dst=movie
    # 'rev'  = ('movie','rev_likes','user')  src=movie -> dst=user
    i = 4
    for layer in ("c1", "c2"):
        for et in ("fwd", "rev"):
            p[f"{layer}_{et}_wl"] = nrm(keys[i], (hidden, hidden), hidden ** -0.5); i += 1
            p[f"{layer}_{et}_wr"] = nrm(keys[i], (hidden, hidden), hidden ** -0.5); i += 1
            p[f"{layer}_{et}_b"] = nrm(keys[i], (1, hidden), hidden ** -0.5); i += 1
    return p


@functools.partial(jax.jit, static_argnames=("num_users", "num_movies"))
def model_forward(params, movie_x, user_node_id, movie_node_id, edge_index,
                  edge_label_index, *, num_users, num_movies):
    bf16 = jnp.bfloat16
    hidden = params["movie_lin_w"].shape[1]
    feat = params["movie_lin_w"].shape[0]
    h_pad = _round_up(max(hidden, LANE), LANE)
    nu_pad = _round_up(num_users, SUBLANE)
    nm_pad = _round_up(num_movies, SUBLANE)
    n_label = edge_label_index.shape[1]
    e_pad = _round_up(max(n_label, EDGE_TILE), EDGE_TILE)

    # --- gathers + zero padding (exact no-op on the math); bf16 MXU operands ---
    # TODO(synk): at real MovieLens sizes move the embedding gathers behind
    # scalar prefetch instead of XLA gathers in the wrapper.
    x_user = _pad2(params["user_emb"][user_node_id], nu_pad, h_pad).astype(bf16)
    m_emb = _pad2(params["movie_emb"][movie_node_id], nm_pad, h_pad).astype(bf16)
    movie_x_p = _pad2(movie_x, nm_pad, feat).astype(bf16)
    wlin = _pad2(params["movie_lin_w"], feat, h_pad).astype(bf16)
    blin = _pad2(params["movie_lin_b"], 1, h_pad)                      # f32 bias

    # --- dense count adjacencies (bf16) + f32 1/deg for both edge types ---
    # TODO(synk): at real MovieLens sizes replace the dense O(N^2) adjacency with a
    # scalar-prefetch CSR segment-mean kernel (O(E*H)) over destination-node tiles.
    a_fwd, d_fwd = build_adjacency(edge_index[0], edge_index[1], nm_pad, nu_pad)
    a_rev, d_rev = build_adjacency(edge_index[1], edge_index[0], nu_pad, nm_pad)

    # --- stacked per-conv weights (bf16) and biases (f32), padded to Hp ---
    def pw(name):
        return _pad2(params[name], h_pad, h_pad).astype(bf16)

    conv_w = jnp.stack([
        pw("c1_fwd_wl"), pw("c1_fwd_wr"),
        pw("c1_rev_wl"), pw("c1_rev_wr"),
        pw("c2_fwd_wl"), pw("c2_fwd_wr"),
        pw("c2_rev_wl"), pw("c2_rev_wr"),
    ])                                                                  # [8, Hp, Hp]
    conv_b = jnp.stack([
        _pad2(params["c1_fwd_b"], 1, h_pad),
        _pad2(params["c1_rev_b"], 1, h_pad),
        _pad2(params["c2_fwd_b"], 1, h_pad),
        _pad2(params["c2_rev_b"], 1, h_pad),
    ])                                                                  # [4, 1, Hp]

    # --- one-hot label-edge selectors (bf16 0/1); padded edges (-1) select nothing ---
    pad_idx = jnp.full((e_pad - n_label,), -1, edge_label_index.dtype)
    su = jax.nn.one_hot(jnp.concatenate([edge_label_index[0], pad_idx]),
                        nu_pad, dtype=bf16)                             # [Epad, Nu_pad]
    sm = jax.nn.one_hot(jnp.concatenate([edge_label_index[1], pad_idx]),
                        nm_pad, dtype=bf16)                             # [Epad, Nm_pad]

    pred = fused_forward(movie_x_p, wlin, blin, x_user, m_emb,
                         a_fwd, d_fwd, a_rev, d_rev, conv_w, conv_b, su, sm)
    return pred[:n_label, 0]


# ---------------------------------- main --------------------------------------

if __name__ == "__main__":
    hidden = 32
    num_users = 16
    num_movies = 12
    movie_feat_dim = 20
    num_edges = 40
    num_label_edges = 16

    key = jax.random.PRNGKey(0)
    k_param, k_x, k_eu, k_em, k_lu, k_lm = jax.random.split(key, 6)

    params = init_params(k_param, hidden, num_users, num_movies, movie_feat_dim)

    movie_x = jax.random.normal(k_x, (num_movies, movie_feat_dim), dtype=jnp.float32)
    user_node_id = jnp.arange(num_users, dtype=jnp.int32)
    movie_node_id = jnp.arange(num_movies, dtype=jnp.int32)
    edge_index = jnp.stack([
        jax.random.randint(k_eu, (num_edges,), 0, num_users),
        jax.random.randint(k_em, (num_edges,), 0, num_movies),
    ]).astype(jnp.int32)
    edge_label_index = jnp.stack([
        jax.random.randint(k_lu, (num_label_edges,), 0, num_users),
        jax.random.randint(k_lm, (num_label_edges,), 0, num_movies),
    ]).astype(jnp.int32)

    pred = model_forward(params, movie_x, user_node_id, movie_node_id,
                         edge_index, edge_label_index,
                         num_users=num_users, num_movies=num_movies)
    pred = jax.block_until_ready(pred)
    assert pred.shape == (num_label_edges,) and pred.dtype == jnp.float32
    print("KERNEL_OK")
</pallas_src>

<mosaic_0001>
module attributes {stable_mosaic.version = 11 : i64} {
  func.func private @main(%arg0: i32) attributes {dimension_semantics = [#tpu.dimension_semantics<core_parallel>], iteration_bounds = array<i64: 2>, tpu.core_type = #tpu.core_type<sc_scalar_subcore>, window_params = []} {
    return
  }
}

module attributes {stable_mosaic.version = 11 : i64} {
  func.func private @main(%arg0: i32) attributes {dimension_semantics = [#tpu.dimension_semantics<core_parallel>], iteration_bounds = array<i64: 2>, tpu.core_type = #tpu.core_type<sc_scalar_subcore>, window_params = []} {
    return
  }
}

module attributes {stable_mosaic.version = 11 : i64} {
  func.func @_fused_kernel(%arg0: i32, %arg1: memref<16x20xbf16, #tpu.memory_space<vmem>>, %arg2: memref<20x128xbf16, #tpu.memory_space<vmem>>, %arg3: memref<1x128xf32, #tpu.memory_space<vmem>>, %arg4: memref<16x128xbf16, #tpu.memory_space<vmem>>, %arg5: memref<16x128xbf16, #tpu.memory_space<vmem>>, %arg6: memref<16x16xbf16, #tpu.memory_space<vmem>>, %arg7: memref<16x1xf32, #tpu.memory_space<vmem>>, %arg8: memref<16x16xbf16, #tpu.memory_space<vmem>>, %arg9: memref<16x1xf32, #tpu.memory_space<vmem>>, %arg10: memref<8x128x128xbf16, #tpu.memory_space<vmem>>, %arg11: memref<4x1x128xf32, #tpu.memory_space<vmem>>, %arg12: memref<128x16xbf16, #tpu.memory_space<vmem>>, %arg13: memref<128x16xbf16, #tpu.memory_space<vmem>>, %arg14: memref<128x1xf32, #tpu.memory_space<vmem>>) attributes {dimension_semantics = [#tpu.dimension_semantics<parallel>], iteration_bounds = array<i64: 1>, scalar_prefetch = 0 : i64, scratch_operands = 0 : i64, tpu.core_type = #tpu.core_type<tc>, window_params = [{pipeline_mode = #tpu.pipeline_mode<synchronous>, transform_indices = @transform_0, window_bounds = array<i64: 16, 20>}, {pipeline_mode = #tpu.pipeline_mode<synchronous>, transform_indices = @transform_1, window_bounds = array<i64: 20, 128>}, {pipeline_mode = #tpu.pipeline_mode<synchronous>, transform_indices = @transform_2, window_bounds = array<i64: 1, 128>}, {pipeline_mode = #tpu.pipeline_mode<synchronous>, transform_indices = @transform_3, window_bounds = array<i64: 16, 128>}, {pipeline_mode = #tpu.pipeline_mode<synchronous>, transform_indices = @transform_4, window_bounds = array<i64: 16, 128>}, {pipeline_mode = #tpu.pipeline_mode<synchronous>, transform_indices = @transform_5, window_bounds = array<i64: 16, 16>}, {pipeline_mode = #tpu.pipeline_mode<synchronous>, transform_indices = @transform_6, window_bounds = array<i64: 16, 1>}, {pipeline_mode = #tpu.pipeline_mode<synchronous>, transform_indices = @transform_7, window_bounds = array<i64: 16, 16>}, {pipeline_mode = #tpu.pipeline_mode<synchronous>, transform_indices = @transform_8, window_bounds = array<i64: 16, 1>}, {pipeline_mode = #tpu.pipeline_mode<synchronous>, transform_indices = @transform_9, window_bounds = array<i64: 8, 128, 128>}, {pipeline_mode = #tpu.pipeline_mode<synchronous>, transform_indices = @transform_10, window_bounds = array<i64: 4, 1, 128>}, {transform_indices = @transform_11, window_bounds = array<i64: 128, 16>}, {transform_indices = @transform_12, window_bounds = array<i64: 128, 16>}, {transform_indices = @transform_13, window_bounds = array<i64: 128, 1>}]} {
    %c0 = arith.constant 0 : index
    %c0_0 = arith.constant 0 : index
    %0 = vector.load %arg1[%c0, %c0_0] : memref<16x20xbf16, #tpu.memory_space<vmem>>, vector<16x20xbf16>
    %c0_1 = arith.constant 0 : index
    %c0_2 = arith.constant 0 : index
    %1 = vector.load %arg2[%c0_1, %c0_2] : memref<20x128xbf16, #tpu.memory_space<vmem>>, vector<20x128xbf16>
    %cst = arith.constant dense<0.000000e+00> : vector<16x128xf32>
    %2 = tpu.matmul %0, %1, %cst {dimension_numbers = #tpu.dot_dimension_numbers<[1], [0], [0], [1], [0, 0, 1, 1], [], []>} : vector<16x20xbf16>, vector<20x128xbf16>, vector<16x128xf32> -> vector<16x128xf32>
    %c0_3 = arith.constant 0 : index
    %c0_4 = arith.constant 0 : index
    %3 = vector.load %arg3[%c0_3, %c0_4] : memref<1x128xf32, #tpu.memory_space<vmem>>, vector<1x128xf32>
    %4 = vector.broadcast %3 : vector<1x128xf32> to vector<16x128xf32>
    %5 = arith.addf %2, %4 : vector<16x128xf32>
    %c0_5 = arith.constant 0 : index
    %c0_6 = arith.constant 0 : index
    %6 = vector.load %arg5[%c0_5, %c0_6] : memref<16x128xbf16, #tpu.memory_space<vmem>>, vector<16x128xbf16>
    %7 = arith.extf %6 : vector<16x128xbf16> to vector<16x128xf32>
    %8 = arith.addf %5, %7 : vector<16x128xf32>
    %c0_7 = arith.constant 0 : index
    %c0_8 = arith.constant 0 : index
    %9 = vector.load %arg4[%c0_7, %c0_8] : memref<16x128xbf16, #tpu.memory_space<vmem>>, vector<16x128xbf16>
    %10 = arith.extf %9 : vector<16x128xbf16> to vector<16x128xf32>
    %c0_9 = arith.constant 0 : index
    %c0_10 = arith.constant 0 : index
    %11 = vector.load %arg6[%c0_9, %c0_10] : memref<16x16xbf16, #tpu.memory_space<vmem>>, vector<16x16xbf16>
    %c0_11 = arith.constant 0 : index
    %c0_12 = arith.constant 0 : index
    %12 = vector.load %arg8[%c0_11, %c0_12] : memref<16x16xbf16, #tpu.memory_space<vmem>>, vector<16x16xbf16>
    %c0_13 = arith.constant 0 : index
    %c0_14 = arith.constant 0 : index
    %13 = vector.load %arg7[%c0_13, %c0_14] : memref<16x1xf32, #tpu.memory_space<vmem>>, vector<16x1xf32>
    %c0_15 = arith.constant 0 : index
    %c0_16 = arith.constant 0 : index
    %14 = vector.load %arg9[%c0_15, %c0_16] : memref<16x1xf32, #tpu.memory_space<vmem>>, vector<16x1xf32>
    %c0_17 = arith.constant 0 : index
    %c0_18 = arith.constant 0 : index
    %c0_19 = arith.constant 0 : index
    %15 = vector.load %arg10[%c0_17, %c0_18, %c0_19] : memref<8x128x128xbf16, #tpu.memory_space<vmem>>, vector<1x128x128xbf16>
    %16 = vector.shape_cast %15 : vector<1x128x128xbf16> to vector<128x128xbf16>
    %c1 = arith.constant 1 : index
    %c0_20 = arith.constant 0 : index
    %c0_21 = arith.constant 0 : index
    %17 = vector.load %arg10[%c1, %c0_20, %c0_21] : memref<8x128x128xbf16, #tpu.memory_space<vmem>>, vector<1x128x128xbf16>
    %18 = vector.shape_cast %17 : vector<1x128x128xbf16> to vector<128x128xbf16>
    %c0_22 = arith.constant 0 : index
    %c0_23 = arith.constant 0 : index
    %c0_24 = arith.constant 0 : index
    %19 = vector.load %arg11[%c0_22, %c0_23, %c0_24] : memref<4x1x128xf32, #tpu.memory_space<vmem>>, vector<1x1x128xf32>
    %20 = vector.shape_cast %19 : vector<1x1x128xf32> to vector<1x128xf32>
    %21 = arith.truncf %10 : vector<16x128xf32> to vector<16x128xbf16>
    %cst_25 = arith.constant dense<0.000000e+00> : vector<16x128xf32>
    %22 = tpu.matmul %11, %21, %cst_25 {dimension_numbers = #tpu.dot_dimension_numbers<[1], [0], [0], [1], [0, 0, 1, 1], [], []>} : vector<16x16xbf16>, vector<16x128xbf16>, vector<16x128xf32> -> vector<16x128xf32>
    %23 = vector.broadcast %13 : vector<16x1xf32> to vector<16x128xf32>
    %24 = arith.mulf %22, %23 : vector<16x128xf32>
    %25 = arith.truncf %24 : vector<16x128xf32> to vector<16x128xbf16>
    %cst_26 = arith.constant dense<0.000000e+00> : vector<16x128xf32>
    %26 = tpu.matmul %25, %16, %cst_26 {dimension_numbers = #tpu.dot_dimension_numbers<[1], [0], [0], [1], [0, 0, 1, 1], [], []>} : vector<16x128xbf16>, vector<128x128xbf16>, vector<16x128xf32> -> vector<16x128xf32>
    %27 = arith.truncf %8 : vector<16x128xf32> to vector<16x128xbf16>
    %cst_27 = arith.constant dense<0.000000e+00> : vector<16x128xf32>
    %28 = tpu.matmul %27, %18, %cst_27 {dimension_numbers = #tpu.dot_dimension_numbers<[1], [0], [0], [1], [0, 0, 1, 1], [], []>} : vector<16x128xbf16>, vector<128x128xbf16>, vector<16x128xf32> -> vector<16x128xf32>
    %29 = arith.addf %26, %28 : vector<16x128xf32>
    %30 = vector.broadcast %20 : vector<1x128xf32> to vector<16x128xf32>
    %31 = arith.addf %29, %30 : vector<16x128xf32>
    %cst_28 = arith.constant 0.000000e+00 : f32
    %32 = vector.broadcast %cst_28 : f32 to vector<16x128xf32>
    %33 = arith.maximumf %31, %32 : vector<16x128xf32>
    %c2 = arith.constant 2 : index
    %c0_29 = arith.constant 0 : index
    %c0_30 = arith.constant 0 : index
    %34 = vector.load %arg10[%c2, %c0_29, %c0_30] : memref<8x128x128xbf16, #tpu.memory_space<vmem>>, vector<1x128x128xbf16>
    %35 = vector.shape_cast %34 : vector<1x128x128xbf16> to vector<128x128xbf16>
    %c3 = arith.constant 3 : index
    %c0_31 = arith.constant 0 : index
    %c0_32 = arith.constant 0 : index
    %36 = vector.load %arg10[%c3, %c0_31, %c0_32] : memref<8x128x128xbf16, #tpu.memory_space<vmem>>, vector<1x128x128xbf16>
    %37 = vector.shape_cast %36 : vector<1x128x128xbf16> to vector<128x128xbf16>
    %c1_33 = arith.constant 1 : index
    %c0_34 = arith.constant 0 : index
    %c0_35 = arith.constant 0 : index
    %38 = vector.load %arg11[%c1_33, %c0_34, %c0_35] : memref<4x1x128xf32, #tpu.memory_space<vmem>>, vector<1x1x128xf32>
    %39 = vector.shape_cast %38 : vector<1x1x128xf32> to vector<1x128xf32>
    %40 = arith.truncf %8 : vector<16x128xf32> to vector<16x128xbf16>
    %cst_36 = arith.constant dense<0.000000e+00> : vector<16x128xf32>
    %41 = tpu.matmul %12, %40, %cst_36 {dimension_numbers = #tpu.dot_dimension_numbers<[1], [0], [0], [1], [0, 0, 1, 1], [], []>} : vector<16x16xbf16>, vector<16x128xbf16>, vector<16x128xf32> -> vector<16x128xf32>
    %42 = vector.broadcast %14 : vector<16x1xf32> to vector<16x128xf32>
    %43 = arith.mulf %41, %42 : vector<16x128xf32>
    %44 = arith.truncf %43 : vector<16x128xf32> to vector<16x128xbf16>
    %cst_37 = arith.constant dense<0.000000e+00> : vector<16x128xf32>
    %45 = tpu.matmul %44, %35, %cst_37 {dimension_numbers = #tpu.dot_dimension_numbers<[1], [0], [0], [1], [0, 0, 1, 1], [], []>} : vector<16x128xbf16>, vector<128x128xbf16>, vector<16x128xf32> -> vector<16x128xf32>
    %46 = arith.truncf %10 : vector<16x128xf32> to vector<16x128xbf16>
    %cst_38 = arith.constant dense<0.000000e+00> : vector<16x128xf32>
    %47 = tpu.matmul %46, %37, %cst_38 {dimension_numbers = #tpu.dot_dimension_numbers<[1], [0], [0], [1], [0, 0, 1, 1], [], []>} : vector<16x128xbf16>, vector<128x128xbf16>, vector<16x128xf32> -> vector<16x128xf32>
    %48 = arith.addf %45, %47 : vector<16x128xf32>
    %49 = vector.broadcast %39 : vector<1x128xf32> to vector<16x128xf32>
    %50 = arith.addf %48, %49 : vector<16x128xf32>
    %cst_39 = arith.constant 0.000000e+00 : f32
    %51 = vector.broadcast %cst_39 : f32 to vector<16x128xf32>
    %52 = arith.maximumf %50, %51 : vector<16x128xf32>
    %c4 = arith.constant 4 : index
    %c0_40 = arith.constant 0 : index
    %c0_41 = arith.constant 0 : index
    %53 = vector.load %arg10[%c4, %c0_40, %c0_41] : memref<8x128x128xbf16, #tpu.memory_space<vmem>>, vector<1x128x128xbf16>
    %54 = vector.shape_cast %53 : vector<1x128x128xbf16> to vector<128x128xbf16>
    %c5 = arith.constant 5 : index
    %c0_42 = arith.constant 0 : index
    %c0_43 = arith.constant 0 : index
    %55 = vector.load %arg10[%c5, %c0_42, %c0_43] : memref<8x128x128xbf16, #tpu.memory_space<vmem>>, vector<1x128x128xbf16>
    %56 = vector.shape_cast %55 : vector<1x128x128xbf16> to vector<128x128xbf16>
    %c2_44 = arith.constant 2 : index
    %c0_45 = arith.constant 0 : index
    %c0_46 = arith.constant 0 : index
    %57 = vector.load %arg11[%c2_44, %c0_45, %c0_46] : memref<4x1x128xf32, #tpu.memory_space<vmem>>, vector<1x1x128xf32>
    %58 = vector.shape_cast %57 : vector<1x1x128xf32> to vector<1x128xf32>
    %59 = arith.truncf %52 : vector<16x128xf32> to vector<16x128xbf16>
    %cst_47 = arith.constant dense<0.000000e+00> : vector<16x128xf32>
    %60 = tpu.matmul %11, %59, %cst_47 {dimension_numbers = #tpu.dot_dimension_numbers<[1], [0], [0], [1], [0, 0, 1, 1], [], []>} : vector<16x16xbf16>, vector<16x128xbf16>, vector<16x128xf32> -> vector<16x128xf32>
    %61 = vector.broadcast %13 : vector<16x1xf32> to vector<16x128xf32>
    %62 = arith.mulf %60, %61 : vector<16x128xf32>
    %63 = arith.truncf %62 : vector<16x128xf32> to vector<16x128xbf16>
    %cst_48 = arith.constant dense<0.000000e+00> : vector<16x128xf32>
    %64 = tpu.matmul %63, %54, %cst_48 {dimension_numbers = #tpu.dot_dimension_numbers<[1], [0], [0], [1], [0, 0, 1, 1], [], []>} : vector<16x128xbf16>, vector<128x128xbf16>, vector<16x128xf32> -> vector<16x128xf32>
    %65 = arith.truncf %33 : vector<16x128xf32> to vector<16x128xbf16>
    %cst_49 = arith.constant dense<0.000000e+00> : vector<16x128xf32>
    %66 = tpu.matmul %65, %56, %cst_49 {dimension_numbers = #tpu.dot_dimension_numbers<[1], [0], [0], [1], [0, 0, 1, 1], [], []>} : vector<16x128xbf16>, vector<128x128xbf16>, vector<16x128xf32> -> vector<16x128xf32>
    %67 = arith.addf %64, %66 : vector<16x128xf32>
    %68 = vector.broadcast %58 : vector<1x128xf32> to vector<16x128xf32>
    %69 = arith.addf %67, %68 : vector<16x128xf32>
    %c6 = arith.constant 6 : index
    %c0_50 = arith.constant 0 : index
    %c0_51 = arith.constant 0 : index
    %70 = vector.load %arg10[%c6, %c0_50, %c0_51] : memref<8x128x128xbf16, #tpu.memory_space<vmem>>, vector<1x128x128xbf16>
    %71 = vector.shape_cast %70 : vector<1x128x128xbf16> to vector<128x128xbf16>
    %c7 = arith.constant 7 : index
    %c0_52 = arith.constant 0 : index
    %c0_53 = arith.constant 0 : index
    %72 = vector.load %arg10[%c7, %c0_52, %c0_53] : memref<8x128x128xbf16, #tpu.memory_space<vmem>>, vector<1x128x128xbf16>
    %73 = vector.shape_cast %72 : vector<1x128x128xbf16> to vector<128x128xbf16>
    %c3_54 = arith.constant 3 : index
    %c0_55 = arith.constant 0 : index
    %c0_56 = arith.constant 0 : index
    %74 = vector.load %arg11[%c3_54, %c0_55, %c0_56] : memref<4x1x128xf32, #tpu.memory_space<vmem>>, vector<1x1x128xf32>
    %75 = vector.shape_cast %74 : vector<1x1x128xf32> to vector<1x128xf32>
    %76 = arith.truncf %33 : vector<16x128xf32> to vector<16x128xbf16>
    %cst_57 = arith.constant dense<0.000000e+00> : vector<16x128xf32>
    %77 = tpu.matmul %12, %76, %cst_57 {dimension_numbers = #tpu.dot_dimension_numbers<[1], [0], [0], [1], [0, 0, 1, 1], [], []>} : vector<16x16xbf16>, vector<16x128xbf16>, vector<16x128xf32> -> vector<16x128xf32>
    %78 = vector.broadcast %14 : vector<16x1xf32> to vector<16x128xf32>
    %79 = arith.mulf %77, %78 : vector<16x128xf32>
    %80 = arith.truncf %79 : vector<16x128xf32> to vector<16x128xbf16>
    %cst_58 = arith.constant dense<0.000000e+00> : vector<16x128xf32>
    %81 = tpu.matmul %80, %71, %cst_58 {dimension_numbers = #tpu.dot_dimension_numbers<[1], [0], [0], [1], [0, 0, 1, 1], [], []>} : vector<16x128xbf16>, vector<128x128xbf16>, vector<16x128xf32> -> vector<16x128xf32>
    %82 = arith.truncf %52 : vector<16x128xf32> to vector<16x128xbf16>
    %cst_59 = arith.constant dense<0.000000e+00> : vector<16x128xf32>
    %83 = tpu.matmul %82, %73, %cst_59 {dimension_numbers = #tpu.dot_dimension_numbers<[1], [0], [0], [1], [0, 0, 1, 1], [], []>} : vector<16x128xbf16>, vector<128x128xbf16>, vector<16x128xf32> -> vector<16x128xf32>
    %84 = arith.addf %81, %83 : vector<16x128xf32>
    %85 = vector.broadcast %75 : vector<1x128xf32> to vector<16x128xf32>
    %86 = arith.addf %84, %85 : vector<16x128xf32>
    %c0_60 = arith.constant 0 : index
    %c0_61 = arith.constant 0 : index
    %87 = vector.load %arg12[%c0_60, %c0_61] : memref<128x16xbf16, #tpu.memory_space<vmem>>, vector<128x16xbf16>
    %88 = arith.truncf %86 : vector<16x128xf32> to vector<16x128xbf16>
    %cst_62 = arith.constant dense<0.000000e+00> : vector<128x128xf32>
    %89 = tpu.matmul %87, %88, %cst_62 {dimension_numbers = #tpu.dot_dimension_numbers<[1], [0], [0], [1], [0, 0, 1, 1], [], []>} : vector<128x16xbf16>, vector<16x128xbf16>, vector<128x128xf32> -> vector<128x128xf32>
    %c0_63 = arith.constant 0 : index
    %c0_64 = arith.constant 0 : index
    %90 = vector.load %arg13[%c0_63, %c0_64] : memref<128x16xbf16, #tpu.memory_space<vmem>>, vector<128x16xbf16>
    %91 = arith.truncf %69 : vector<16x128xf32> to vector<16x128xbf16>
    %cst_65 = arith.constant dense<0.000000e+00> : vector<128x128xf32>
    %92 = tpu.matmul %90, %91, %cst_65 {dimension_numbers = #tpu.dot_dimension_numbers<[1], [0], [0], [1], [0, 0, 1, 1], [], []>} : vector<128x16xbf16>, vector<16x128xbf16>, vector<128x128xf32> -> vector<128x128xf32>
    %93 = arith.mulf %89, %92 : vector<128x128xf32>
    %cst_66 = arith.constant dense<0.000000e+00> : vector<128xf32>
    %94 = vector.multi_reduction <add>, %93, %cst_66 [1] : vector<128x128xf32> to vector<128xf32>
    %95 = vector.shape_cast %94 : vector<128xf32> to vector<128x1xf32>
    %c0_67 = arith.constant 0 : index
    %c0_68 = arith.constant 0 : index
    %96 = vector.load %arg14[%c0_67, %c0_68] : memref<128x1xf32, #tpu.memory_space<vmem>>, vector<128x1xf32>
    tpu.vector_store %arg14[%c0_67, %c0_68], %95 {strides = array<i32>} : memref<128x1xf32, #tpu.memory_space<vmem>>, vector<128x1xf32>,
    return
  }
  func.func @transform_0(%arg0: i32) -> (i32, i32) {
    %c0_i32 = arith.constant 0 : i32
    %c0_i32_0 = arith.constant 0 : i32
    %c0_i32_1 = arith.constant 0 : i32
    return %c0_i32, %c0_i32_0 : i32, i32
  }
  func.func @transform_1(%arg0: i32) -> (i32, i32) {
    %c0_i32 = arith.constant 0 : i32
    %c0_i32_0 = arith.constant 0 : i32
    %c0_i32_1 = arith.constant 0 : i32
    return %c0_i32, %c0_i32_0 : i32, i32
  }
  func.func @transform_2(%arg0: i32) -> (i32, i32) {
    %c0_i32 = arith.constant 0 : i32
    %c0_i32_0 = arith.constant 0 : i32
    %c0_i32_1 = arith.constant 0 : i32
    return %c0_i32, %c0_i32_0 : i32, i32
  }
  func.func @transform_3(%arg0: i32) -> (i32, i32) {
    %c0_i32 = arith.constant 0 : i32
    %c0_i32_0 = arith.constant 0 : i32
    %c0_i32_1 = arith.constant 0 : i32
    return %c0_i32, %c0_i32_0 : i32, i32
  }
  func.func @transform_4(%arg0: i32) -> (i32, i32) {
    %c0_i32 = arith.constant 0 : i32
    %c0_i32_0 = arith.constant 0 : i32
    %c0_i32_1 = arith.constant 0 : i32
    return %c0_i32, %c0_i32_0 : i32, i32
  }
  func.func @transform_5(%arg0: i32) -> (i32, i32) {
    %c0_i32 = arith.constant 0 : i32
    %c0_i32_0 = arith.constant 0 : i32
    %c0_i32_1 = arith.constant 0 : i32
    return %c0_i32, %c0_i32_0 : i32, i32
  }
  func.func @transform_6(%arg0: i32) -> (i32, i32) {
    %c0_i32 = arith.constant 0 : i32
    %c0_i32_0 = arith.constant 0 : i32
    %c0_i32_1 = arith.constant 0 : i32
    return %c0_i32, %c0_i32_0 : i32, i32
  }
  func.func @transform_7(%arg0: i32) -> (i32, i32) {
    %c0_i32 = arith.constant 0 : i32
    %c0_i32_0 = arith.constant 0 : i32
    %c0_i32_1 = arith.constant 0 : i32
    return %c0_i32, %c0_i32_0 : i32, i32
  }
  func.func @transform_8(%arg0: i32) -> (i32, i32) {
    %c0_i32 = arith.constant 0 : i32
    %c0_i32_0 = arith.constant 0 : i32
    %c0_i32_1 = arith.constant 0 : i32
    return %c0_i32, %c0_i32_0 : i32, i32
  }
  func.func @transform_9(%arg0: i32) -> (i32, i32, i32) {
    %c0_i32 = arith.constant 0 : i32
    %c0_i32_0 = arith.constant 0 : i32
    %c0_i32_1 = arith.constant 0 : i32
    %c0_i32_2 = arith.constant 0 : i32
    return %c0_i32, %c0_i32_0, %c0_i32_1 : i32, i32, i32
  }
  func.func @transform_10(%arg0: i32) -> (i32, i32, i32) {
    %c0_i32 = arith.constant 0 : i32
    %c0_i32_0 = arith.constant 0 : i32
    %c0_i32_1 = arith.constant 0 : i32
    %c0_i32_2 = arith.constant 0 : i32
    return %c0_i32, %c0_i32_0, %c0_i32_1 : i32, i32, i32
  }
  func.func @transform_11(%arg0: i32) -> (i32, i32) {
    %c0_i32 = arith.constant 0 : i32
    %c0_i32_0 = arith.constant 0 : i32
    return %arg0, %c0_i32 : i32, i32
  }
  func.func @transform_12(%arg0: i32) -> (i32, i32) {
    %c0_i32 = arith.constant 0 : i32
    %c0_i32_0 = arith.constant 0 : i32
    return %arg0, %c0_i32 : i32, i32
  }
  func.func @transform_13(%arg0: i32) -> (i32, i32) {
    %c0_i32 = arith.constant 0 : i32
    %c0_i32_0 = arith.constant 0 : i32
    return %arg0, %c0_i32 : i32, i32
  }
}

</mosaic_0001>

<llo_original>
// kernel: model_forward.1
$region0: #{model_forward.1}
  #allocation0 [shape = 'u32[]', space=smem, size = 0x4, offset = 0x4, fixed_abs, tag = 'smem constant byte address 0x4 - core index']
  #allocation1 [shape = 'u32[144,128]{1,0:T(1,128)}', space=vmem, size = 0x12000, scoped, tag = 'internal scratch']
  %s0 = inlined_call_operand.vmem [shape: bf16[16,20], index: 0, kind: input, shape index: {}]
  %s1 = inlined_call_operand.vmem [shape: bf16[20,128], index: 1, kind: input, shape index: {}]
  %s2 = inlined_call_operand.vmem [shape: f32[1,128], index: 2, kind: input, shape index: {}]
  %s3 = inlined_call_operand.vmem [shape: bf16[16,128], index: 3, kind: input, shape index: {}]
  %s4 = inlined_call_operand.vmem [shape: bf16[16,128], index: 4, kind: input, shape index: {}]
  %s5 = inlined_call_operand.vmem [shape: bf16[16,16], index: 5, kind: input, shape index: {}]
  %s6 = inlined_call_operand.vmem [shape: f32[16,1], index: 6, kind: input, shape index: {}]
  %s7 = inlined_call_operand.vmem [shape: bf16[16,16], index: 7, kind: input, shape index: {}]
  %s8 = inlined_call_operand.vmem [shape: f32[16,1], index: 8, kind: input, shape index: {}]
  %s9 = inlined_call_operand.vmem [shape: bf16[8,128,128], index: 9, kind: input, shape index: {}]
  %s10 = inlined_call_operand.vmem [shape: f32[4,1,128], index: 10, kind: input, shape index: {}]
  %s11 = inlined_call_operand.vmem [shape: bf16[128,16], index: 11, kind: input, shape index: {}]
  %s12 = inlined_call_operand.vmem [shape: bf16[128,16], index: 12, kind: input, shape index: {}]
  %s13 = inlined_call_operand.vmem [shape: f32[128,1], index: 13, kind: output, shape index: {}]
  %s14 = sld [smem:[#allocation0]]
  $region62: #{model_forward.1} parent=0
    _
  %s16 = ssub.s32 1, %s14
  %s17 = scalar_select 0, %s16, %s14
  // Predicated region
  $region2: #{model_forward.1} parent=0 // pred_check
    _
  $region3: #{model_forward.1} parent=0 // pred_check_branch
    %19 = sbr.rel (0) target = $region5
  $region4: #{model_forward.1} parent=0 // pred_region
    _
  $region5: #{model_forward.1} parent=0 // pred_fallthru
    _
  // Predicated region
  $region6: #{model_forward.1} parent=0 // pred_check
    _
  $region7: #{model_forward.1} parent=0 // pred_check_branch
    %21 = sbr.rel (0) target = $region9
  $region8: #{model_forward.1} parent=0 // pred_region
    _
  $region9: #{model_forward.1} parent=0 // pred_fallthru
    _
  // Predicated region
  $region10: #{model_forward.1} parent=0 // pred_check
    _
  $region11: #{model_forward.1} parent=0 // pred_check_branch
    %23 = sbr.rel (0) target = $region13
  $region12: #{model_forward.1} parent=0 // pred_region
    _
  $region13: #{model_forward.1} parent=0 // pred_fallthru
    _
  // Predicated region
  $region14: #{model_forward.1} parent=0 // pred_check
    _
  $region15: #{model_forward.1} parent=0 // pred_check_branch
    %25 = sbr.rel (0) target = $region17
  $region16: #{model_forward.1} parent=0 // pred_region
    _
  $region17: #{model_forward.1} parent=0 // pred_fallthru
    _
  // Predicated region
  $region18: #{model_forward.1} parent=0 // pred_check
    _
  $region19: #{model_forward.1} parent=0 // pred_check_branch
    %27 = sbr.rel (0) target = $region21
  $region20: #{model_forward.1} parent=0 // pred_region
    _
  $region21: #{model_forward.1} parent=0 // pred_fallthru
    _
  // Predicated region
  $region22: #{model_forward.1} parent=0 // pred_check
    _
  $region23: #{model_forward.1} parent=0 // pred_check_branch
    %29 = sbr.rel (0) target = $region25
  $region24: #{model_forward.1} parent=0 // pred_region
    _
  $region25: #{model_forward.1} parent=0 // pred_fallthru
    _
  // Predicated region
  $region26: #{model_forward.1} parent=0 // pred_check
    _
  $region27: #{model_forward.1} parent=0 // pred_check_branch
    %31 = sbr.rel (0) target = $region29
  $region28: #{model_forward.1} parent=0 // pred_region
    _
  $region29: #{model_forward.1} parent=0 // pred_fallthru
    _
  // Predicated region
  $region30: #{model_forward.1} parent=0 // pred_check
    _
  $region31: #{model_forward.1} parent=0 // pred_check_branch
    %33 = sbr.rel (0) target = $region33
  $region32: #{model_forward.1} parent=0 // pred_region
    _
  $region33: #{model_forward.1} parent=0 // pred_fallthru
    _
  // Predicated region
  $region34: #{model_forward.1} parent=0 // pred_check
    _
  $region35: #{model_forward.1} parent=0 // pred_check_branch
    %35 = sbr.rel (0) target = $region37
  $region36: #{model_forward.1} parent=0 // pred_region
    _
  $region37: #{model_forward.1} parent=0 // pred_fallthru
    _
  // Predicated region
  $region38: #{model_forward.1} parent=0 // pred_check
    _
  $region39: #{model_forward.1} parent=0 // pred_check_branch
    %37 = sbr.rel (0) target = $region41
  $region40: #{model_forward.1} parent=0 // pred_region
    _
  $region41: #{model_forward.1} parent=0 // pred_fallthru
    _
  // Predicated region
  $region42: #{model_forward.1} parent=0 // pred_check
    _
  $region43: #{model_forward.1} parent=0 // pred_check_branch
    %39 = sbr.rel (0) target = $region45
  $region44: #{model_forward.1} parent=0 // pred_region
    _
  $region45: #{model_forward.1} parent=0 // pred_fallthru
    _
  // Predicated region
  $region46: #{model_forward.1} parent=0 // pred_check
    _
  $region47: #{model_forward.1} parent=0 // pred_check_branch
    %41 = sbr.rel (0) target = $region49
  $region48: #{model_forward.1} parent=0 // pred_region
    _
  $region49: #{model_forward.1} parent=0 // pred_fallthru
    _
  // Predicated region
  $region50: #{model_forward.1} parent=0 // pred_check
    _
  $region51: #{model_forward.1} parent=0 // pred_check_branch
    %43 = sbr.rel (0) target = $region53
  $region52: #{model_forward.1} parent=0 // pred_region
    _
  $region53: #{model_forward.1} parent=0 // pred_fallthru
    _
  %v45 = vld [vmem:[%s0] sm:$0xf]
  %v46 = vld [vmem:[%s0 + $0x4] sm:$0xf]
  %v47 = vld [vmem:[%s1] sm:$0xf]
  %v48 = vld [vmem:[%s1 + $0x4] sm:$0xf]
  %v49 = vld [vmem:[%s1 + $0x8] sm:$0x3]
  %v50 = vld [vmem:[%s2] sm:$0x1]
  %v52 = vlaneseq
  %v53 = vshrl.u32 %v52, 7
  %v54 = vsub.s32 0, %v53
  %v55 = vrot.slane %v50, %v54
  %v59 = vunpack.c.l.b16 %v45
  %v60 = vunpack.c.l.b16 %v46
  %v61 = vpack.c.b16 %v60, %v59
  %v65 = vunpack.c.l.b16 %v47
  %v66 = vunpack.c.l.b16 %v48
  %v67 = vunpack.c.l.b16 %v49
  %v68 = vpack.c.b16 %v66, %v65
  %v69 = vpack.c.b16 %v67, %v67
  %vm71 = vcmask 162816
  %v73 = vsel %vm71, %v61, 0
  %vm75 = vcmask 1041408
  %v77 = vsel %vm75, %v69, 0
  %79 = vmatprep.subr.bf16.mxu0 0
  %80 = vmatpush1.bf16.msra.mxu0 0
  %81 = vmatprep.subr.bf16.mxu0 0
  %82 = vmatpush1.bf16.msra.mxu0 0
  %83 = vmatprep.subr.bf16.mxu0 0
  %84 = vmatpush1.bf16.msra.mxu0 0
  %85 = vmatprep.subr.bf16.mxu0 0
  %86 = vmatpush1.bf16.msra.mxu0 0
  %87 = vmatprep.subr.bf16.mxu0 0
  %88 = vmatpush1.bf16.msra.mxu0 0
  %89 = vmatprep.subr.bf16.mxu0 0
  %90 = vmatpush1.bf16.msra.mxu0 0
  %91 = vmatprep.subr.bf16.mxu0 0
  %92 = vmatpush1.bf16.msra.mxu0 %v77
  %93 = vmatprep.subr.bf16.mxu0 0
  %94 = vmatpush1.bf16.msra.mxu0 %v68
  %95 = vmatprep.subr.bf16.mxu0 0
  %96 = vmatpush2.bf16.msra.mxu0 0
  %97 = vmatprep.subr.bf16.mxu0 0
  %98 = vmatpush2.bf16.msra.mxu0 0
  %99 = vmatprep.subr.bf16.mxu0 0
  %100 = vmatpush2.bf16.msra.mxu0 0
  %101 = vmatprep.subr.bf16.mxu0 0
  %102 = vmatpush2.bf16.msra.mxu0 0
  %103 = vmatprep.subr.bf16.mxu0 0
  %104 = vmatpush2.bf16.msra.mxu0 0
  %105 = vmatprep.subr.bf16.mxu0 0
  %106 = vmatpush2.bf16.msra.mxu0 0
  %107 = vmatprep.subr.bf16.mxu0 0
  %108 = vmatpush2.bf16.msra.mxu0 0
  %109 = vmatprep.subr.bf16.mxu0 0
  %110 = vmatpush2.bf16.msra.mxu0 0
  %111 = vmatprep.mubr.bf16.mxu0 0
  %112 = vmatmul.mubr.bf16.gmra.mxu0 %v73
  %v113 = vpop.f32.mrf.mxu0
  %v114 = vadd.f32 %v55, %v113
  %v115 = vpop.f32.mrf.mxu0
  %v116 = vpop.f32.mrf.mxu0
  %v117 = vadd.f32 %v55, %v116
  %v118 = vpop.f32.mrf.mxu0
  %119 = vdwg.mxu0
  %v120 = vld [vmem:[%s4] sm:$0xf]
  %v121 = vld [vmem:[%s4 + $0x4] sm:$0xf]
  %v122 = vunpack.c.l.bf16 %v120
  %v123 = vunpack.c.l.bf16 %v121
  %v124 = vadd.f32 %v114, %v122
  %v125 = vadd.f32 %v117, %v123
  %v126 = vld [vmem:[%s3] sm:$0xf]
  %v127 = vld [vmem:[%s3 + $0x4] sm:$0xf]
  %v128 = vld [vmem:[%s5] sm:$0xf]
  %v129 = vld [vmem:[%s5 + $0x4] sm:$0xf]
  %v130 = vld [vmem:[%s7] sm:$0xf]
  %v131 = vld [vmem:[%s7 + $0x4] sm:$0xf]
  %v132 = vld [vmem:[%s6] sm:$0xff]
  %v133 = vld [vmem:[%s6 + $0x8] sm:$0xff]
  %v134 = vld [vmem:[%s8] sm:$0xff]
  %v135 = vld [vmem:[%s8 + $0x8] sm:$0xff]
  %v136 = vld [vmem:[%s9] sm:$0xf]
  %v137 = vld [vmem:[%s9 + $0x4] sm:$0xf]
  %v138 = vld [vmem:[%s9 + $0x8] sm:$0xf]
  %v139 = vld [vmem:[%s9 + $0xc] sm:$0xf]
  %v140 = vld [vmem:[%s9 + $0x10] sm:$0xf]
  %v141 = vld [vmem:[%s9 + $0x14] sm:$0xf]
  %v142 = vld [vmem:[%s9 + $0x18] sm:$0xf]
  %v143 = vld [vmem:[%s9 + $0x1c] sm:$0xf]
  %v144 = vld [vmem:[%s9 + $0x20] sm:$0xf]
  %v145 = vld [vmem:[%s9 + $0x24] sm:$0xf]
  %v146 = vld [vmem:[%s9 + $0x28] sm:$0xf]
  %v147 = vld [vmem:[%s9 + $0x2c] sm:$0xf]
  %v148 = vld [vmem:[%s9 + $0x30] sm:$0xf]
  %v149 = vld [vmem:[%s9 + $0x34] sm:$0xf]
  %v150 = vld [vmem:[%s9 + $0x38] sm:$0xf]
  %v151 = vld [vmem:[%s9 + $0x3c] sm:$0xf]
  %s152 = scalar_lea.vmem %s9, 64
  %v153 = vld [vmem:[%s152] sm:$0xf]
  %v154 = vld [vmem:[%s152 + $0x4] sm:$0xf]
  %v155 = vld [vmem:[%s152 + $0x8] sm:$0xf]
  %v156 = vld [vmem:[%s152 + $0xc] sm:$0xf]
  %v157 = vld [vmem:[%s152 + $0x10] sm:$0xf]
  %v158 = vld [vmem:[%s152 + $0x14] sm:$0xf]
  %v159 = vld [vmem:[%s152 + $0x18] sm:$0xf]
  %v160 = vld [vmem:[%s152 + $0x1c] sm:$0xf]
  %v161 = vld [vmem:[%s152 + $0x20] sm:$0xf]
  %v162 = vld [vmem:[%s152 + $0x24] sm:$0xf]
  %v163 = vld [vmem:[%s152 + $0x28] sm:$0xf]
  %v164 = vld [vmem:[%s152 + $0x2c] sm:$0xf]
  %v165 = vld [vmem:[%s152 + $0x30] sm:$0xf]
  %v166 = vld [vmem:[%s152 + $0x34] sm:$0xf]
  %v167 = vld [vmem:[%s152 + $0x38] sm:$0xf]
  %v168 = vld [vmem:[%s152 + $0x3c] sm:$0xf]
  %v169 = vld [vmem:[%s10] sm:$0x1]
  %v172 = vunpack.c.l.b16 %v128
  %v173 = vunpack.c.l.b16 %v129
  %v174 = vpack.c.b16 %v173, %v172
  %v177 = vunpack.c.l.b16 %v126
  %v178 = vunpack.c.l.b16 %v127
  %v179 = vpack.c.b16 %v178, %v177
  %vm181 = vcmask 130048
  %v183 = vsel %vm181, %v174, 0
  %185 = vmatprep.subr.bf16.mxu0 0
  %186 = vmatpush1.bf16.msra.mxu0 0
  %187 = vmatprep.subr.bf16.mxu0 0
  %188 = vmatpush1.bf16.msra.mxu0 0
  %189 = vmatprep.subr.bf16.mxu0 0
  %190 = vmatpush1.bf16.msra.mxu0 0
  %191 = vmatprep.subr.bf16.mxu0 0
  %192 = vmatpush1.bf16.msra.mxu0 0
  %193 = vmatprep.subr.bf16.mxu0 0
  %194 = vmatpush1.bf16.msra.mxu0 0
  %195 = vmatprep.subr.bf16.mxu0 0
  %196 = vmatpush1.bf16.msra.mxu0 0
  %197 = vmatprep.subr.bf16.mxu0 0
  %198 = vmatpush1.bf16.msra.mxu0 0
  %199 = vmatprep.subr.bf16.mxu0 0
  %200 = vmatpush1.bf16.msra.mxu0 %v179
  %201 = vmatprep.subr.bf16.mxu0 0
  %202 = vmatpush2.bf16.msra.mxu0 0
  %203 = vmatprep.subr.bf16.mxu0 0
  %204 = vmatpush2.bf16.msra.mxu0 0
  %205 = vmatprep.subr.bf16.mxu0 0
  %206 = vmatpush2.bf16.msra.mxu0 0
  %207 = vmatprep.subr.bf16.mxu0 0
  %208 = vmatpush2.bf16.msra.mxu0 0
  %209 = vmatprep.subr.bf16.mxu0 0
  %210 = vmatpush2.bf16.msra.mxu0 0
  %211 = vmatprep.subr.bf16.mxu0 0
  %212 = vmatpush2.bf16.msra.mxu0 0
  %213 = vmatprep.subr.bf16.mxu0 0
  %214 = vmatpush2.bf16.msra.mxu0 0
  %215 = vmatprep.subr.bf16.mxu0 0
  %216 = vmatpush2.bf16.msra.mxu0 0
  %217 = vmatprep.mubr.bf16.mxu0 0
  %218 = vmatmul.mubr.bf16.gmra.mxu0 %v183
  %v219 = vpop.f32.mrf.mxu0
  %v220 = vadd.f32 0.0, %v219
  %v221 = vpop.f32.mrf.mxu0
  %v222 = vpop.f32.mrf.mxu0
  %v223 = vadd.f32 0.0, %v222
  %v224 = vpop.f32.mrf.mxu0
  %225 = vdwg.mxu0
  %227 = vset.pattern.permute.xlu0 0
  %228 = vperm.xlu0 %227, %v132
  %v229 = vpop.permute.xlu0 %228
  %232 = vset.pattern.permute.xlu0 0
  %233 = vperm.xlu0 %232, %v133
  %v234 = vpop.permute.xlu0 %233
  %v236 = vmul.f32 %v220, %v229
  %v237 = vmul.f32 %v223, %v234
  %v238 = vpack.c.bf16 %v237, %v236
  %v239 = vpack.c.bf16 %v125, %v124
  %v256 = vunpack.c.l.b16 %v153
  %v257 = vunpack.c.l.b16 %v154
  %v258 = vunpack.c.l.b16 %v155
  %v259 = vunpack.c.l.b16 %v156
  %v260 = vunpack.c.l.b16 %v157
  %v261 = vunpack.c.l.b16 %v158
  %v262 = vunpack.c.l.b16 %v159
  %v263 = vunpack.c.l.b16 %v160
  %v264 = vunpack.c.l.b16 %v161
  %v265 = vunpack.c.l.b16 %v162
  %v266 = vunpack.c.l.b16 %v163
  %v267 = vunpack.c.l.b16 %v164
  %v268 = vunpack.c.l.b16 %v165
  %v269 = vunpack.c.l.b16 %v166
  %v270 = vunpack.c.l.b16 %v167
  %v271 = vunpack.c.l.b16 %v168
  %v272 = vpack.c.b16 %v257, %v256
  %v273 = vpack.c.b16 %v259, %v258
  %v274 = vpack.c.b16 %v261, %v260
  %v275 = vpack.c.b16 %v263, %v262
  %v276 = vpack.c.b16 %v265, %v264
  %v277 = vpack.c.b16 %v267, %v266
  %v278 = vpack.c.b16 %v269, %v268
  %v279 = vpack.c.b16 %v271, %v270
  %288 = vmatprep.subr.bf16.mxu0 0
  %289 = vmatpush1.bf16.msra.mxu0 %v279
  %290 = vmatprep.subr.bf16.mxu0 0
  %291 = vmatpush1.bf16.msra.mxu0 %v278
  %292 = vmatprep.subr.bf16.mxu0 0
  %293 = vmatpush1.bf16.msra.mxu0 %v277
  %294 = vmatprep.subr.bf16.mxu0 0
  %295 = vmatpush1.bf16.msra.mxu0 %v276
  %296 = vmatprep.subr.bf16.mxu0 0
  %297 = vmatpush1.bf16.msra.mxu0 %v275
  %298 = vmatprep.subr.bf16.mxu0 0
  %299 = vmatpush1.bf16.msra.mxu0 %v274
  %300 = vmatprep.subr.bf16.mxu0 0
  %301 = vmatpush1.bf16.msra.mxu0 %v273
  %302 = vmatprep.subr.bf16.mxu0 0
  %303 = vmatpush1.bf16.msra.mxu0 %v272
  %304 = vmatprep.subr.bf16.mxu0 0
  %305 = vmatpush2.bf16.msra.mxu0 0
  %306 = vmatprep.subr.bf16.mxu0 0
  %307 = vmatpush2.bf16.msra.mxu0 0
  %308 = vmatprep.subr.bf16.mxu0 0
  %309 = vmatpush2.bf16.msra.mxu0 0
  %310 = vmatprep.subr.bf16.mxu0 0
  %311 = vmatpush2.bf16.msra.mxu0 0
  %312 = vmatprep.subr.bf16.mxu0 0
  %313 = vmatpush2.bf16.msra.mxu0 0
  %314 = vmatprep.subr.bf16.mxu0 0
  %315 = vmatpush2.bf16.msra.mxu0 0
  %316 = vmatprep.subr.bf16.mxu0 0
  %317 = vmatpush2.bf16.msra.mxu0 0
  %318 = vmatprep.subr.bf16.mxu0 0
  %319 = vmatpush2.bf16.msra.mxu0 0
  %320 = vmatprep.mubr.bf16.mxu0 0
  %321 = vmatmul.mubr.bf16.gmra.mxu0 %v239
  %v322 = vpop.f32.mrf.mxu0
  %v323 = vadd.f32 0.0, %v322
  %v324 = vpop.f32.mrf.mxu0
  %v325 = vpop.f32.mrf.mxu0
  %v326 = vadd.f32 0.0, %v325
  %v327 = vpop.f32.mrf.mxu0
  %328 = vdwg.mxu0
  %v345 = vunpack.c.l.b16 %v136
  %v346 = vunpack.c.l.b16 %v137
  %v347 = vunpack.c.l.b16 %v138
  %v348 = vunpack.c.l.b16 %v139
  %v349 = vunpack.c.l.b16 %v140
  %v350 = vunpack.c.l.b16 %v141
  %v351 = vunpack.c.l.b16 %v142
  %v352 = vunpack.c.l.b16 %v143
  %v353 = vunpack.c.l.b16 %v144
  %v354 = vunpack.c.l.b16 %v145
  %v355 = vunpack.c.l.b16 %v146
  %v356 = vunpack.c.l.b16 %v147
  %v357 = vunpack.c.l.b16 %v148
  %v358 = vunpack.c.l.b16 %v149
  %v359 = vunpack.c.l.b16 %v150
  %v360 = vunpack.c.l.b16 %v151
  %v361 = vpack.c.b16 %v346, %v345
  %v362 = vpack.c.b16 %v348, %v347
  %v363 = vpack.c.b16 %v350, %v349
  %v364 = vpack.c.b16 %v352, %v351
  %v365 = vpack.c.b16 %v354, %v353
  %v366 = vpack.c.b16 %v356, %v355
  %v367 = vpack.c.b16 %v358, %v357
  %v368 = vpack.c.b16 %v360, %v359
  %377 = vmatprep.subr.bf16.mxu0 0
  %378 = vmatpush1.bf16.msra.mxu0 %v368
  %379 = vmatprep.subr.bf16.mxu0 0
  %380 = vmatpush1.bf16.msra.mxu0 %v367
  %381 = vmatprep.subr.bf16.mxu0 0
  %382 = vmatpush1.bf16.msra.mxu0 %v366
  %383 = vmatprep.subr.bf16.mxu0 0
  %384 = vmatpush1.bf16.msra.mxu0 %v365
  %385 = vmatprep.subr.bf16.mxu0 0
  %386 = vmatpush1.bf16.msra.mxu0 %v364
  %387 = vmatprep.subr.bf16.mxu0 0
  %388 = vmatpush1.bf16.msra.mxu0 %v363
  %389 = vmatprep.subr.bf16.mxu0 0
  %390 = vmatpush1.bf16.msra.mxu0 %v362
  %391 = vmatprep.subr.bf16.mxu0 0
  %392 = vmatpush1.bf16.msra.mxu0 %v361
  %393 = vmatprep.subr.bf16.mxu0 0
  %394 = vmatpush2.bf16.msra.mxu0 0
  %395 = vmatprep.subr.bf16.mxu0 0
  %396 = vmatpush2.bf16.msra.mxu0 0
  %397 = vmatprep.subr.bf16.mxu0 0
  %398 = vmatpush2.bf16.msra.mxu0 0
  %399 = vmatprep.subr.bf16.mxu0 0
  %400 = vmatpush2.bf16.msra.mxu0 0
  %401 = vmatprep.subr.bf16.mxu0 0
  %402 = vmatpush2.bf16.msra.mxu0 0
  %403 = vmatprep.subr.bf16.mxu0 0
  %404 = vmatpush2.bf16.msra.mxu0 0
  %405 = vmatprep.subr.bf16.mxu0 0
  %406 = vmatpush2.bf16.msra.mxu0 0
  %407 = vmatprep.subr.bf16.mxu0 0
  %408 = vmatpush2.bf16.msra.mxu0 0
  %409 = vmatprep.mubr.bf16.mxu0 0
  %410 = vmatmul.mubr.bf16.gmra.mxu0 %v238
  %v411 = vpop.f32.mrf.mxu0
  %v412 = vadd.f32 %v323, %v411
  %v413 = vpop.f32.mrf.mxu0
  %v414 = vpop.f32.mrf.mxu0
  %v415 = vadd.f32 %v326, %v414
  %v416 = vpop.f32.mrf.mxu0
  %417 = vdwg.mxu0
  %v419 = vlaneseq
  %v420 = vshrl.u32 %v419, 7
  %v421 = vsub.s32 0, %v420
  %v422 = vrot.slane %v169, %v421
  %v424 = vadd.f32 %v412, %v422
  %v425 = vadd.f32 %v415, %v422
  %v426 = vmax.f32 %v424, 0.0
  %v427 = vmax.f32 %v425, 0.0
  %s428 = scalar_lea.vmem %s9, 128
  %v429 = vld [vmem:[%s428] sm:$0xf]
  %v430 = vld [vmem:[%s428 + $0x4] sm:$0xf]
  %v431 = vld [vmem:[%s428 + $0x8] sm:$0xf]
  %v432 = vld [vmem:[%s428 + $0xc] sm:$0xf]
  %v433 = vld [vmem:[%s428 + $0x10] sm:$0xf]
  %v434 = vld [vmem:[%s428 + $0x14] sm:$0xf]
  %v435 = vld [vmem:[%s428 + $0x18] sm:$0xf]
  %v436 = vld [vmem:[%s428 + $0x1c] sm:$0xf]
  %v437 = vld [vmem:[%s428 + $0x20] sm:$0xf]
  %v438 = vld [vmem:[%s428 + $0x24] sm:$0xf]
  %v439 = vld [vmem:[%s428 + $0x28] sm:$0xf]
  %v440 = vld [vmem:[%s428 + $0x2c] sm:$0xf]
  %v441 = vld [vmem:[%s428 + $0x30] sm:$0xf]
  %v442 = vld [vmem:[%s428 + $0x34] sm:$0xf]
  %v443 = vld [vmem:[%s428 + $0x38] sm:$0xf]
  %v444 = vld [vmem:[%s428 + $0x3c] sm:$0xf]
  %s445 = scalar_lea.vmem %s9, 192
  %v446 = vld [vmem:[%s445] sm:$0xf]
  %v447 = vld [vmem:[%s445 + $0x4] sm:$0xf]
  %v448 = vld [vmem:[%s445 + $0x8] sm:$0xf]
  %v449 = vld [vmem:[%s445 + $0xc] sm:$0xf]
  %v450 = vld [vmem:[%s445 + $0x10] sm:$0xf]
  %v451 = vld [vmem:[%s445 + $0x14] sm:$0xf]
  %v452 = vld [vmem:[%s445 + $0x18] sm:$0xf]
  %v453 = vld [vmem:[%s445 + $0x1c] sm:$0xf]
  %v454 = vld [vmem:[%s445 + $0x20] sm:$0xf]
  %v455 = vld [vmem:[%s445 + $0x24] sm:$0xf]
  %v456 = vld [vmem:[%s445 + $0x28] sm:$0xf]
  %v457 = vld [vmem:[%s445 + $0x2c] sm:$0xf]
  %v458 = vld [vmem:[%s445 + $0x30] sm:$0xf]
  %v459 = vld [vmem:[%s445 + $0x34] sm:$0xf]
  %v460 = vld [vmem:[%s445 + $0x38] sm:$0xf]
  %v461 = vld [vmem:[%s445 + $0x3c] sm:$0xf]
  %s462 = scalar_lea.vmem %s10, 1
  %v463 = vld [vmem:[%s462] sm:$0x1]
  %v466 = vunpack.c.l.b16 %v130
  %v467 = vunpack.c.l.b16 %v131
  %v468 = vpack.c.b16 %v467, %v466
  %v470 = vsel %vm181, %v468, 0
  %472 = vmatprep.subr.bf16.mxu0 0
  %473 = vmatpush1.bf16.msra.mxu0 0
  %474 = vmatprep.subr.bf16.mxu0 0
  %475 = vmatpush1.bf16.msra.mxu0 0
  %476 = vmatprep.subr.bf16.mxu0 0
  %477 = vmatpush1.bf16.msra.mxu0 0
  %478 = vmatprep.subr.bf16.mxu0 0
  %479 = vmatpush1.bf16.msra.mxu0 0
  %480 = vmatprep.subr.bf16.mxu0 0
  %481 = vmatpush1.bf16.msra.mxu0 0
  %482 = vmatprep.subr.bf16.mxu0 0
  %483 = vmatpush1.bf16.msra.mxu0 0
  %484 = vmatprep.subr.bf16.mxu0 0
  %485 = vmatpush1.bf16.msra.mxu0 0
  %486 = vmatprep.subr.bf16.mxu0 0
  %487 = vmatpush1.bf16.msra.mxu0 %v239
  %488 = vmatprep.subr.bf16.mxu0 0
  %489 = vmatpush2.bf16.msra.mxu0 0
  %490 = vmatprep.subr.bf16.mxu0 0
  %491 = vmatpush2.bf16.msra.mxu0 0
  %492 = vmatprep.subr.bf16.mxu0 0
  %493 = vmatpush2.bf16.msra.mxu0 0
  %494 = vmatprep.subr.bf16.mxu0 0
  %495 = vmatpush2.bf16.msra.mxu0 0
  %496 = vmatprep.subr.bf16.mxu0 0
  %497 = vmatpush2.bf16.msra.mxu0 0
  %498 = vmatprep.subr.bf16.mxu0 0
  %499 = vmatpush2.bf16.msra.mxu0 0
  %500 = vmatprep.subr.bf16.mxu0 0
  %501 = vmatpush2.bf16.msra.mxu0 0
  %502 = vmatprep.subr.bf16.mxu0 0
  %503 = vmatpush2.bf16.msra.mxu0 0
  %504 = vmatprep.mubr.bf16.mxu0 0
  %505 = vmatmul.mubr.bf16.gmra.mxu0 %v470
  %v506 = vpop.f32.mrf.mxu0
  %v507 = vadd.f32 0.0, %v506
  %v508 = vpop.f32.mrf.mxu0
  %v509 = vpop.f32.mrf.mxu0
  %v510 = vadd.f32 0.0, %v509
  %v511 = vpop.f32.mrf.mxu0
  %512 = vdwg.mxu0
  %514 = vset.pattern.permute.xlu0 0
  %515 = vperm.xlu0 %514, %v134
  %v516 = vpop.permute.xlu0 %515
  %519 = vset.pattern.permute.xlu0 0
  %520 = vperm.xlu0 %519, %v135
  %v521 = vpop.permute.xlu0 %520
  %v523 = vmul.f32 %v507, %v516
  %v524 = vmul.f32 %v510, %v521
  %v525 = vpack.c.bf16 %v524, %v523
  %v542 = vunpack.c.l.b16 %v446
  %v543 = vunpack.c.l.b16 %v447
  %v544 = vunpack.c.l.b16 %v448
  %v545 = vunpack.c.l.b16 %v449
  %v546 = vunpack.c.l.b16 %v450
  %v547 = vunpack.c.l.b16 %v451
  %v548 = vunpack.c.l.b16 %v452
  %v549 = vunpack.c.l.b16 %v453
  %v550 = vunpack.c.l.b16 %v454
  %v551 = vunpack.c.l.b16 %v455
  %v552 = vunpack.c.l.b16 %v456
  %v553 = vunpack.c.l.b16 %v457
  %v554 = vunpack.c.l.b16 %v458
  %v555 = vunpack.c.l.b16 %v459
  %v556 = vunpack.c.l.b16 %v460
  %v557 = vunpack.c.l.b16 %v461
  %v558 = vpack.c.b16 %v543, %v542
  %v559 = vpack.c.b16 %v545, %v544
  %v560 = vpack.c.b16 %v547, %v546
  %v561 = vpack.c.b16 %v549, %v548
  %v562 = vpack.c.b16 %v551, %v550
  %v563 = vpack.c.b16 %v553, %v552
  %v564 = vpack.c.b16 %v555, %v554
  %v565 = vpack.c.b16 %v557, %v556
  %574 = vmatprep.subr.bf16.mxu0 0
  %575 = vmatpush1.bf16.msra.mxu0 %v565
  %576 = vmatprep.subr.bf16.mxu0 0
  %577 = vmatpush1.bf16.msra.mxu0 %v564
  %578 = vmatprep.subr.bf16.mxu0 0
  %579 = vmatpush1.bf16.msra.mxu0 %v563
  %580 = vmatprep.subr.bf16.mxu0 0
  %581 = vmatpush1.bf16.msra.mxu0 %v562
  %582 = vmatprep.subr.bf16.mxu0 0
  %583 = vmatpush1.bf16.msra.mxu0 %v561
  %584 = vmatprep.subr.bf16.mxu0 0
  %585 = vmatpush1.bf16.msra.mxu0 %v560
  %586 = vmatprep.subr.bf16.mxu0 0
  %587 = vmatpush1.bf16.msra.mxu0 %v559
  %588 = vmatprep.subr.bf16.mxu0 0
  %589 = vmatpush1.bf16.msra.mxu0 %v558
  %590 = vmatprep.subr.bf16.mxu0 0
  %591 = vmatpush2.bf16.msra.mxu0 0
  %592 = vmatprep.subr.bf16.mxu0 0
  %593 = vmatpush2.bf16.msra.mxu0 0
  %594 = vmatprep.subr.bf16.mxu0 0
  %595 = vmatpush2.bf16.msra.mxu0 0
  %596 = vmatprep.subr.bf16.mxu0 0
  %597 = vmatpush2.bf16.msra.mxu0 0
  %598 = vmatprep.subr.bf16.mxu0 0
  %599 = vmatpush2.bf16.msra.mxu0 0
  %600 = vmatprep.subr.bf16.mxu0 0
  %601 = vmatpush2.bf16.msra.mxu0 0
  %602 = vmatprep.subr.bf16.mxu0 0
  %603 = vmatpush2.bf16.msra.mxu0 0
  %604 = vmatprep.subr.bf16.mxu0 0
  %605 = vmatpush2.bf16.msra.mxu0 0
  %606 = vmatprep.mubr.bf16.mxu0 0
  %607 = vmatmul.mubr.bf16.gmra.mxu0 %v179
  %v608 = vpop.f32.mrf.mxu0
  %v609 = vadd.f32 0.0, %v608
  %v610 = vpop.f32.mrf.mxu0
  %v611 = vpop.f32.mrf.mxu0
  %v612 = vadd.f32 0.0, %v611
  %v613 = vpop.f32.mrf.mxu0
  %614 = vdwg.mxu0
  %v631 = vunpack.c.l.b16 %v429
  %v632 = vunpack.c.l.b16 %v430
  %v633 = vunpack.c.l.b16 %v431
  %v634 = vunpack.c.l.b16 %v432
  %v635 = vunpack.c.l.b16 %v433
  %v636 = vunpack.c.l.b16 %v434
  %v637 = vunpack.c.l.b16 %v435
  %v638 = vunpack.c.l.b16 %v436
  %v639 = vunpack.c.l.b16 %v437
  %v640 = vunpack.c.l.b16 %v438
  %v641 = vunpack.c.l.b16 %v439
  %v642 = vunpack.c.l.b16 %v440
  %v643 = vunpack.c.l.b16 %v441
  %v644 = vunpack.c.l.b16 %v442
  %v645 = vunpack.c.l.b16 %v443
  %v646 = vunpack.c.l.b16 %v444
  %v647 = vpack.c.b16 %v632, %v631
  %v648 = vpack.c.b16 %v634, %v633
  %v649 = vpack.c.b16 %v636, %v635
  %v650 = vpack.c.b16 %v638, %v637
  %v651 = vpack.c.b16 %v640, %v639
  %v652 = vpack.c.b16 %v642, %v641
  %v653 = vpack.c.b16 %v644, %v643
  %v654 = vpack.c.b16 %v646, %v645
  %663 = vmatprep.subr.bf16.mxu0 0
  %664 = vmatpush1.bf16.msra.mxu0 %v654
  %665 = vmatprep.subr.bf16.mxu0 0
  %666 = vmatpush1.bf16.msra.mxu0 %v653
  %667 = vmatprep.subr.bf16.mxu0 0
  %668 = vmatpush1.bf16.msra.mxu0 %v652
  %669 = vmatprep.subr.bf16.mxu0 0
  %670 = vmatpush1.bf16.msra.mxu0 %v651
  %671 = vmatprep.subr.bf16.mxu0 0
  %672 = vmatpush1.bf16.msra.mxu0 %v650
  %673 = vmatprep.subr.bf16.mxu0 0
  %674 = vmatpush1.bf16.msra.mxu0 %v649
  %675 = vmatprep.subr.bf16.mxu0 0
  %676 = vmatpush1.bf16.msra.mxu0 %v648
  %677 = vmatprep.subr.bf16.mxu0 0
  %678 = vmatpush1.bf16.msra.mxu0 %v647
  %679 = vmatprep.subr.bf16.mxu0 0
  %680 = vmatpush2.bf16.msra.mxu0 0
  %681 = vmatprep.subr.bf16.mxu0 0
  %682 = vmatpush2.bf16.msra.mxu0 0
  %683 = vmatprep.subr.bf16.mxu0 0
  %684 = vmatpush2.bf16.msra.mxu0 0
  %685 = vmatprep.subr.bf16.mxu0 0
  %686 = vmatpush2.bf16.msra.mxu0 0
  %687 = vmatprep.subr.bf16.mxu0 0
  %688 = vmatpush2.bf16.msra.mxu0 0
  %689 = vmatprep.subr.bf16.mxu0 0
  %690 = vmatpush2.bf16.msra.mxu0 0
  %691 = vmatprep.subr.bf16.mxu0 0
  %692 = vmatpush2.bf16.msra.mxu0 0
  %693 = vmatprep.subr.bf16.mxu0 0
  %694 = vmatpush2.bf16.msra.mxu0 0
  %695 = vmatprep.mubr.bf16.mxu0 0
  %696 = vmatmul.mubr.bf16.gmra.mxu0 %v525
  %v697 = vpop.f32.mrf.mxu0
  %v698 = vadd.f32 %v609, %v697
  %v699 = vpop.f32.mrf.mxu0
  %v700 = vpop.f32.mrf.mxu0
  %v701 = vadd.f32 %v612, %v700
  %v702 = vpop.f32.mrf.mxu0
  %703 = vdwg.mxu0
  %v705 = vlaneseq
  %v706 = vshrl.u32 %v705, 7
  %v707 = vsub.s32 0, %v706
  %v708 = vrot.slane %v463, %v707
  %v710 = vadd.f32 %v698, %v708
  %v711 = vadd.f32 %v701, %v708
  %v712 = vmax.f32 %v710, 0.0
  %v713 = vmax.f32 %v711, 0.0
  %s714 = scalar_lea.vmem %s9, 256
  %v715 = vld [vmem:[%s714] sm:$0xf]
  %v716 = vld [vmem:[%s714 + $0x4] sm:$0xf]
  %v717 = vld [vmem:[%s714 + $0x8] sm:$0xf]
  %v718 = vld [vmem:[%s714 + $0xc] sm:$0xf]
  %v719 = vld [vmem:[%s714 + $0x10] sm:$0xf]
  %v720 = vld [vmem:[%s714 + $0x14] sm:$0xf]
  %v721 = vld [vmem:[%s714 + $0x18] sm:$0xf]
  %v722 = vld [vmem:[%s714 + $0x1c] sm:$0xf]
  %v723 = vld [vmem:[%s714 + $0x20] sm:$0xf]
  %v724 = vld [vmem:[%s714 + $0x24] sm:$0xf]
  %v725 = vld [vmem:[%s714 + $0x28] sm:$0xf]
  %v726 = vld [vmem:[%s714 + $0x2c] sm:$0xf]
  %v727 = vld [vmem:[%s714 + $0x30] sm:$0xf]
  %v728 = vld [vmem:[%s714 + $0x34] sm:$0xf]
  %v729 = vld [vmem:[%s714 + $0x38] sm:$0xf]
  %v730 = vld [vmem:[%s714 + $0x3c] sm:$0xf]
  %s731 = scalar_lea.vmem %s9, 320
  %v732 = vld [vmem:[%s731] sm:$0xf]
  %v733 = vld [vmem:[%s731 + $0x4] sm:$0xf]
  %v734 = vld [vmem:[%s731 + $0x8] sm:$0xf]
  %v735 = vld [vmem:[%s731 + $0xc] sm:$0xf]
  %v736 = vld [vmem:[%s731 + $0x10] sm:$0xf]
  %v737 = vld [vmem:[%s731 + $0x14] sm:$0xf]
  %v738 = vld [vmem:[%s731 + $0x18] sm:$0xf]
  %v739 = vld [vmem:[%s731 + $0x1c] sm:$0xf]
  %v740 = vld [vmem:[%s731 + $0x20] sm:$0xf]
  %v741 = vld [vmem:[%s731 + $0x24] sm:$0xf]
  %v742 = vld [vmem:[%s731 + $0x28] sm:$0xf]
  %v743 = vld [vmem:[%s731 + $0x2c] sm:$0xf]
  %v744 = vld [vmem:[%s731 + $0x30] sm:$0xf]
  %v745 = vld [vmem:[%s731 + $0x34] sm:$0xf]
  %v746 = vld [vmem:[%s731 + $0x38] sm:$0xf]
  %v747 = vld [vmem:[%s731 + $0x3c] sm:$0xf]
  %s748 = scalar_lea.vmem %s10, 2
  %v749 = vld [vmem:[%s748] sm:$0x1]
  %v750 = vpack.c.bf16 %v713, %v712
  %751 = vmatprep.subr.bf16.mxu0 0
  %752 = vmatpush1.bf16.msra.mxu0 0
  %753 = vmatprep.subr.bf16.mxu0 0
  %754 = vmatpush1.bf16.msra.mxu0 0
  %755 = vmatprep.subr.bf16.mxu0 0
  %756 = vmatpush1.bf16.msra.mxu0 0
  %757 = vmatprep.subr.bf16.mxu0 0
  %758 = vmatpush1.bf16.msra.mxu0 0
  %759 = vmatprep.subr.bf16.mxu0 0
  %760 = vmatpush1.bf16.msra.mxu0 0
  %761 = vmatprep.subr.bf16.mxu0 0
  %762 = vmatpush1.bf16.msra.mxu0 0
  %763 = vmatprep.subr.bf16.mxu0 0
  %764 = vmatpush1.bf16.msra.mxu0 0
  %765 = vmatprep.subr.bf16.mxu0 0
  %766 = vmatpush1.bf16.msra.mxu0 %v750
  %767 = vmatprep.subr.bf16.mxu0 0
  %768 = vmatpush2.bf16.msra.mxu0 0
  %769 = vmatprep.subr.bf16.mxu0 0
  %770 = vmatpush2.bf16.msra.mxu0 0
  %771 = vmatprep.subr.bf16.mxu0 0
  %772 = vmatpush2.bf16.msra.mxu0 0
  %773 = vmatprep.subr.bf16.mxu0 0
  %774 = vmatpush2.bf16.msra.mxu0 0
  %775 = vmatprep.subr.bf16.mxu0 0
  %776 = vmatpush2.bf16.msra.mxu0 0
  %777 = vmatprep.subr.bf16.mxu0 0
  %778 = vmatpush2.bf16.msra.mxu0 0
  %779 = vmatprep.subr.bf16.mxu0 0
  %780 = vmatpush2.bf16.msra.mxu0 0
  %781 = vmatprep.subr.bf16.mxu0 0
  %782 = vmatpush2.bf16.msra.mxu0 0
  %783 = vmatprep.mubr.bf16.mxu0 0
  %784 = vmatmul.mubr.bf16.gmra.mxu0 %v183
  %v785 = vpop.f32.mrf.mxu0
  %v786 = vadd.f32 0.0, %v785
  %v787 = vpop.f32.mrf.mxu0
  %v788 = vpop.f32.mrf.mxu0
  %v789 = vadd.f32 0.0, %v788
  %v790 = vpop.f32.mrf.mxu0
  %791 = vdwg.mxu0
  %v792 = vmul.f32 %v786, %v229
  %v793 = vmul.f32 %v789, %v234
  %v794 = vpack.c.bf16 %v793, %v792
  %v795 = vpack.c.bf16 %v427, %v426
  %v812 = vunpack.c.l.b16 %v732
  %v813 = vunpack.c.l.b16 %v733
  %v814 = vunpack.c.l.b16 %v734
  %v815 = vunpack.c.l.b16 %v735
  %v816 = vunpack.c.l.b16 %v736
  %v817 = vunpack.c.l.b16 %v737
  %v818 = vunpack.c.l.b16 %v738
  %v819 = vunpack.c.l.b16 %v739
  %v820 = vunpack.c.l.b16 %v740
  %v821 = vunpack.c.l.b16 %v741
  %v822 = vunpack.c.l.b16 %v742
  %v823 = vunpack.c.l.b16 %v743
  %v824 = vunpack.c.l.b16 %v744
  %v825 = vunpack.c.l.b16 %v745
  %v826 = vunpack.c.l.b16 %v746
  %v827 = vunpack.c.l.b16 %v747
  %v828 = vpack.c.b16 %v813, %v812
  %v829 = vpack.c.b16 %v815, %v814
  %v830 = vpack.c.b16 %v817, %v816
  %v831 = vpack.c.b16 %v819, %v818
  %v832 = vpack.c.b16 %v821, %v820
  %v833 = vpack.c.b16 %v823, %v822
  %v834 = vpack.c.b16 %v825, %v824
  %v835 = vpack.c.b16 %v827, %v826
  %844 = vmatprep.subr.bf16.mxu0 0
  %845 = vmatpush1.bf16.msra.mxu0 %v835
  %846 = vmatprep.subr.bf16.mxu0 0
  %847 = vmatpush1.bf16.msra.mxu0 %v834
  %848 = vmatprep.subr.bf16.mxu0 0
  %849 = vmatpush1.bf16.msra.mxu0 %v833
  %850 = vmatprep.subr.bf16.mxu0 0
  %851 = vmatpush1.bf16.msra.mxu0 %v832
  %852 = vmatprep.subr.bf16.mxu0 0
  %853 = vmatpush1.bf16.msra.mxu0 %v831
  %854 = vmatprep.subr.bf16.mxu0 0
  %855 = vmatpush1.bf16.msra.mxu0 %v830
  %856 = vmatprep.subr.bf16.mxu0 0
  %857 = vmatpush1.bf16.msra.mxu0 %v829
  %858 = vmatprep.subr.bf16.mxu0 0
  %859 = vmatpush1.bf16.msra.mxu0 %v828
  %860 = vmatprep.subr.bf16.mxu0 0
  %861 = vmatpush2.bf16.msra.mxu0 0
  %862 = vmatprep.subr.bf16.mxu0 0
  %863 = vmatpush2.bf16.msra.mxu0 0
  %864 = vmatprep.subr.bf16.mxu0 0
  %865 = vmatpush2.bf16.msra.mxu0 0
  %866 = vmatprep.subr.bf16.mxu0 0
  %867 = vmatpush2.bf16.msra.mxu0 0
  %868 = vmatprep.subr.bf16.mxu0 0
  %869 = vmatpush2.bf16.msra.mxu0 0
  %870 = vmatprep.subr.bf16.mxu0 0
  %871 = vmatpush2.bf16.msra.mxu0 0
  %872 = vmatprep.subr.bf16.mxu0 0
  %873 = vmatpush2.bf16.msra.mxu0 0
  %874 = vmatprep.subr.bf16.mxu0 0
  %875 = vmatpush2.bf16.msra.mxu0 0
  %876 = vmatprep.mubr.bf16.mxu0 0
  %877 = vmatmul.mubr.bf16.gmra.mxu0 %v795
  %v878 = vpop.f32.mrf.mxu0
  %v879 = vadd.f32 0.0, %v878
  %v880 = vpop.f32.mrf.mxu0
  %v881 = vpop.f32.mrf.mxu0
  %v882 = vadd.f32 0.0, %v881
  %v883 = vpop.f32.mrf.mxu0
  %884 = vdwg.mxu0
  %v901 = vunpack.c.l.b16 %v715
  %v902 = vunpack.c.l.b16 %v716
  %v903 = vunpack.c.l.b16 %v717
  %v904 = vunpack.c.l.b16 %v718
  %v905 = vunpack.c.l.b16 %v719
  %v906 = vunpack.c.l.b16 %v720
  %v907 = vunpack.c.l.b16 %v721
  %v908 = vunpack.c.l.b16 %v722
  %v909 = vunpack.c.l.b16 %v723
  %v910 = vunpack.c.l.b16 %v724
  %v911 = vunpack.c.l.b16 %v725
  %v912 = vunpack.c.l.b16 %v726
  %v913 = vunpack.c.l.b16 %v727
  %v914 = vunpack.c.l.b16 %v728
  %v915 = vunpack.c.l.b16 %v729
  %v916 = vunpack.c.l.b16 %v730
  %v917 = vpack.c.b16 %v902, %v901
  %v918 = vpack.c.b16 %v904, %v903
  %v919 = vpack.c.b16 %v906, %v905
  %v920 = vpack.c.b16 %v908, %v907
  %v921 = vpack.c.b16 %v910, %v909
  %v922 = vpack.c.b16 %v912, %v911
  %v923 = vpack.c.b16 %v914, %v913
  %v924 = vpack.c.b16 %v916, %v915
  %933 = vmatprep.subr.bf16.mxu0 0
  %934 = vmatpush1.bf16.msra.mxu0 %v924
  %935 = vmatprep.subr.bf16.mxu0 0
  %936 = vmatpush1.bf16.msra.mxu0 %v923
  %937 = vmatprep.subr.bf16.mxu0 0
  %938 = vmatpush1.bf16.msra.mxu0 %v922
  %939 = vmatprep.subr.bf16.mxu0 0
  %940 = vmatpush1.bf16.msra.mxu0 %v921
  %941 = vmatprep.subr.bf16.mxu0 0
  %942 = vmatpush1.bf16.msra.mxu0 %v920
  %943 = vmatprep.subr.bf16.mxu0 0
  %944 = vmatpush1.bf16.msra.mxu0 %v919
  %945 = vmatprep.subr.bf16.mxu0 0
  %946 = vmatpush1.bf16.msra.mxu0 %v918
  %947 = vmatprep.subr.bf16.mxu0 0
  %948 = vmatpush1.bf16.msra.mxu0 %v917
  %949 = vmatprep.subr.bf16.mxu0 0
  %950 = vmatpush2.bf16.msra.mxu0 0
  %951 = vmatprep.subr.bf16.mxu0 0
  %952 = vmatpush2.bf16.msra.mxu0 0
  %953 = vmatprep.subr.bf16.mxu0 0
  %954 = vmatpush2.bf16.msra.mxu0 0
  %955 = vmatprep.subr.bf16.mxu0 0
  %956 = vmatpush2.bf16.msra.mxu0 0
  %957 = vmatprep.subr.bf16.mxu0 0
  %958 = vmatpush2.bf16.msra.mxu0 0
  %959 = vmatprep.subr.bf16.mxu0 0
  %960 = vmatpush2.bf16.msra.mxu0 0
  %961 = vmatprep.subr.bf16.mxu0 0
  %962 = vmatpush2.bf16.msra.mxu0 0
  %963 = vmatprep.subr.bf16.mxu0 0
  %964 = vmatpush2.bf16.msra.mxu0 0
  %965 = vmatprep.mubr.bf16.mxu0 0
  %966 = vmatmul.mubr.bf16.gmra.mxu0 %v794
  %v967 = vpop.f32.mrf.mxu0
  %v968 = vadd.f32 %v879, %v967
  %v969 = vpop.f32.mrf.mxu0
  %v970 = vpop.f32.mrf.mxu0
  %v971 = vadd.f32 %v882, %v970
  %v972 = vpop.f32.mrf.mxu0
  %973 = vdwg.mxu0
  %v975 = vlaneseq
  %v976 = vshrl.u32 %v975, 7
  %v977 = vsub.s32 0, %v976
  %v978 = vrot.slane %v749, %v977
  %v980 = vadd.f32 %v968, %v978
  %v981 = vadd.f32 %v971, %v978
  %s982 = scalar_lea.vmem %s9, 384
  %v983 = vld [vmem:[%s982] sm:$0xf]
  %v984 = vld [vmem:[%s982 + $0x4] sm:$0xf]
  %v985 = vld [vmem:[%s982 + $0x8] sm:$0xf]
  %v986 = vld [vmem:[%s982 + $0xc] sm:$0xf]
  %v987 = vld [vmem:[%s982 + $0x10] sm:$0xf]
  %v988 = vld [vmem:[%s982 + $0x14] sm:$0xf]
  %v989 = vld [vmem:[%s982 + $0x18] sm:$0xf]
  %v990 = vld [vmem:[%s982 + $0x1c] sm:$0xf]
  %v991 = vld [vmem:[%s982 + $0x20] sm:$0xf]
  %v992 = vld [vmem:[%s982 + $0x24] sm:$0xf]
  %v993 = vld [vmem:[%s982 + $0x28] sm:$0xf]
  %v994 = vld [vmem:[%s982 + $0x2c] sm:$0xf]
  %v995 = vld [vmem:[%s982 + $0x30] sm:$0xf]
  %v996 = vld [vmem:[%s982 + $0x34] sm:$0xf]
  %v997 = vld [vmem:[%s982 + $0x38] sm:$0xf]
  %v998 = vld [vmem:[%s982 + $0x3c] sm:$0xf]
  %s999 = scalar_lea.vmem %s9, 448
  %v1000 = vld [vmem:[%s999] sm:$0xf]
  %v1001 = vld [vmem:[%s999 + $0x4] sm:$0xf]
  %v1002 = vld [vmem:[%s999 + $0x8] sm:$0xf]
  %v1003 = vld [vmem:[%s999 + $0xc] sm:$0xf]
  %v1004 = vld [vmem:[%s999 + $0x10] sm:$0xf]
  %v1005 = vld [vmem:[%s999 + $0x14] sm:$0xf]
  %v1006 = vld [vmem:[%s999 + $0x18] sm:$0xf]
  %v1007 = vld [vmem:[%s999 + $0x1c] sm:$0xf]
  %v1008 = vld [vmem:[%s999 + $0x20] sm:$0xf]
  %v1009 = vld [vmem:[%s999 + $0x24] sm:$0xf]
  %v1010 = vld [vmem:[%s999 + $0x28] sm:$0xf]
  %v1011 = vld [vmem:[%s999 + $0x2c] sm:$0xf]
  %v1012 = vld [vmem:[%s999 + $0x30] sm:$0xf]
  %v1013 = vld [vmem:[%s999 + $0x34] sm:$0xf]
  %v1014 = vld [vmem:[%s999 + $0x38] sm:$0xf]
  %v1015 = vld [vmem:[%s999 + $0x3c] sm:$0xf]
  %s1016 = scalar_lea.vmem %s10, 3
  %v1017 = vld [vmem:[%s1016] sm:$0x1]
  %1018 = vmatprep.subr.bf16.mxu0 0
  %1019 = vmatpush1.bf16.msra.mxu0 0
  %1020 = vmatprep.subr.bf16.mxu0 0
  %1021 = vmatpush1.bf16.msra.mxu0 0
  %1022 = vmatprep.subr.bf16.mxu0 0
  %1023 = vmatpush1.bf16.msra.mxu0 0
  %1024 = vmatprep.subr.bf16.mxu0 0
  %1025 = vmatpush1.bf16.msra.mxu0 0
  %1026 = vmatprep.subr.bf16.mxu0 0
  %1027 = vmatpush1.bf16.msra.mxu0 0
  %1028 = vmatprep.subr.bf16.mxu0 0
  %1029 = vmatpush1.bf16.msra.mxu0 0
  %1030 = vmatprep.subr.bf16.mxu0 0
  %1031 = vmatpush1.bf16.msra.mxu0 0
  %1032 = vmatprep.subr.bf16.mxu0 0
  %1033 = vmatpush1.bf16.msra.mxu0 %v795
  %1034 = vmatprep.subr.bf16.mxu0 0
  %1035 = vmatpush2.bf16.msra.mxu0 0
  %1036 = vmatprep.subr.bf16.mxu0 0
  %1037 = vmatpush2.bf16.msra.mxu0 0
  %1038 = vmatprep.subr.bf16.mxu0 0
  %1039 = vmatpush2.bf16.msra.mxu0 0
  %1040 = vmatprep.subr.bf16.mxu0 0
  %1041 = vmatpush2.bf16.msra.mxu0 0
  %1042 = vmatprep.subr.bf16.mxu0 0
  %1043 = vmatpush2.bf16.msra.mxu0 0
  %1044 = vmatprep.subr.bf16.mxu0 0
  %1045 = vmatpush2.bf16.msra.mxu0 0
  %1046 = vmatprep.subr.bf16.mxu0 0
  %1047 = vmatpush2.bf16.msra.mxu0 0
  %1048 = vmatprep.subr.bf16.mxu0 0
  %1049 = vmatpush2.bf16.msra.mxu0 0
  %1050 = vmatprep.mubr.bf16.mxu0 0
  %1051 = vmatmul.mubr.bf16.gmra.mxu0 %v470
  %v1052 = vpop.f32.mrf.mxu0
  %v1053 = vadd.f32 0.0, %v1052
  %v1054 = vpop.f32.mrf.mxu0
  %v1055 = vpop.f32.mrf.mxu0
  %v1056 = vadd.f32 0.0, %v1055
  %v1057 = vpop.f32.mrf.mxu0
  %1058 = vdwg.mxu0
  %v1059 = vmul.f32 %v1053, %v516
  %v1060 = vmul.f32 %v1056, %v521
  %v1061 = vpack.c.bf16 %v1060, %v1059
  %v1078 = vunpack.c.l.b16 %v1000
  %v1079 = vunpack.c.l.b16 %v1001
  %v1080 = vunpack.c.l.b16 %v1002
  %v1081 = vunpack.c.l.b16 %v1003
  %v1082 = vunpack.c.l.b16 %v1004
  %v1083 = vunpack.c.l.b16 %v1005
  %v1084 = vunpack.c.l.b16 %v1006
  %v1085 = vunpack.c.l.b16 %v1007
  %v1086 = vunpack.c.l.b16 %v1008
  %v1087 = vunpack.c.l.b16 %v1009
  %v1088 = vunpack.c.l.b16 %v1010
  %v1089 = vunpack.c.l.b16 %v1011
  %v1090 = vunpack.c.l.b16 %v1012
  %v1091 = vunpack.c.l.b16 %v1013
  %v1092 = vunpack.c.l.b16 %v1014
  %v1093 = vunpack.c.l.b16 %v1015
  %v1094 = vpack.c.b16 %v1079, %v1078
  %v1095 = vpack.c.b16 %v1081, %v1080
  %v1096 = vpack.c.b16 %v1083, %v1082
  %v1097 = vpack.c.b16 %v1085, %v1084
  %v1098 = vpack.c.b16 %v1087, %v1086
  %v1099 = vpack.c.b16 %v1089, %v1088
  %v1100 = vpack.c.b16 %v1091, %v1090
  %v1101 = vpack.c.b16 %v1093, %v1092
  %1110 = vmatprep.subr.bf16.mxu0 0
  %1111 = vmatpush1.bf16.msra.mxu0 %v1101
  %1112 = vmatprep.subr.bf16.mxu0 0
  %1113 = vmatpush1.bf16.msra.mxu0 %v1100
  %1114 = vmatprep.subr.bf16.mxu0 0
  %1115 = vmatpush1.bf16.msra.mxu0 %v1099
  %1116 = vmatprep.subr.bf16.mxu0 0
  %1117 = vmatpush1.bf16.msra.mxu0 %v1098
  %1118 = vmatprep.subr.bf16.mxu0 0
  %1119 = vmatpush1.bf16.msra.mxu0 %v1097
  %1120 = vmatprep.subr.bf16.mxu0 0
  %1121 = vmatpush1.bf16.msra.mxu0 %v1096
  %1122 = vmatprep.subr.bf16.mxu0 0
  %1123 = vmatpush1.bf16.msra.mxu0 %v1095
  %1124 = vmatprep.subr.bf16.mxu0 0
  %1125 = vmatpush1.bf16.msra.mxu0 %v1094
  %1126 = vmatprep.subr.bf16.mxu0 0
  %1127 = vmatpush2.bf16.msra.mxu0 0
  %1128 = vmatprep.subr.bf16.mxu0 0
  %1129 = vmatpush2.bf16.msra.mxu0 0
  %1130 = vmatprep.subr.bf16.mxu0 0
  %1131 = vmatpush2.bf16.msra.mxu0 0
  %1132 = vmatprep.subr.bf16.mxu0 0
  %1133 = vmatpush2.bf16.msra.mxu0 0
  %1134 = vmatprep.subr.bf16.mxu0 0
  %1135 = vmatpush2.bf16.msra.mxu0 0
  %1136 = vmatprep.subr.bf16.mxu0 0
  %1137 = vmatpush2.bf16.msra.mxu0 0
  %1138 = vmatprep.subr.bf16.mxu0 0
  %1139 = vmatpush2.bf16.msra.mxu0 0
  %1140 = vmatprep.subr.bf16.mxu0 0
  %1141 = vmatpush2.bf16.msra.mxu0 0
  %1142 = vmatprep.mubr.bf16.mxu0 0
  %1143 = vmatmul.mubr.bf16.gmra.mxu0 %v750
  %v1144 = vpop.f32.mrf.mxu0
  %v1145 = vadd.f32 0.0, %v1144
  %v1146 = vpop.f32.mrf.mxu0
  %v1147 = vpop.f32.mrf.mxu0
  %v1148 = vadd.f32 0.0, %v1147
  %v1149 = vpop.f32.mrf.mxu0
  %1150 = vdwg.mxu0
  %v1167 = vunpack.c.l.b16 %v983
  %v1168 = vunpack.c.l.b16 %v984
  %v1169 = vunpack.c.l.b16 %v985
  %v1170 = vunpack.c.l.b16 %v986
  %v1171 = vunpack.c.l.b16 %v987
  %v1172 = vunpack.c.l.b16 %v988
  %v1173 = vunpack.c.l.b16 %v989
  %v1174 = vunpack.c.l.b16 %v990
  %v1175 = vunpack.c.l.b16 %v991
  %v1176 = vunpack.c.l.b16 %v992
  %v1177 = vunpack.c.l.b16 %v993
  %v1178 = vunpack.c.l.b16 %v994
  %v1179 = vunpack.c.l.b16 %v995
  %v1180 = vunpack.c.l.b16 %v996
  %v1181 = vunpack.c.l.b16 %v997
  %v1182 = vunpack.c.l.b16 %v998
  %v1183 = vpack.c.b16 %v1168, %v1167
  %v1184 = vpack.c.b16 %v1170, %v1169
  %v1185 = vpack.c.b16 %v1172, %v1171
  %v1186 = vpack.c.b16 %v1174, %v1173
  %v1187 = vpack.c.b16 %v1176, %v1175
  %v1188 = vpack.c.b16 %v1178, %v1177
  %v1189 = vpack.c.b16 %v1180, %v1179
  %v1190 = vpack.c.b16 %v1182, %v1181
  %1199 = vmatprep.subr.bf16.mxu0 0
  %1200 = vmatpush1.bf16.msra.mxu0 %v1190
  %1201 = vmatprep.subr.bf16.mxu0 0
  %1202 = vmatpush1.bf16.msra.mxu0 %v1189
  %1203 = vmatprep.subr.bf16.mxu0 0
  %1204 = vmatpush1.bf16.msra.mxu0 %v1188
  %1205 = vmatprep.subr.bf16.mxu0 0
  %1206 = vmatpush1.bf16.msra.mxu0 %v1187
  %1207 = vmatprep.subr.bf16.mxu0 0
  %1208 = vmatpush1.bf16.msra.mxu0 %v1186
  %1209 = vmatprep.subr.bf16.mxu0 0
  %1210 = vmatpush1.bf16.msra.mxu0 %v1185
  %1211 = vmatprep.subr.bf16.mxu0 0
  %1212 = vmatpush1.bf16.msra.mxu0 %v1184
  %1213 = vmatprep.subr.bf16.mxu0 0
  %1214 = vmatpush1.bf16.msra.mxu0 %v1183
  %1215 = vmatprep.subr.bf16.mxu0 0
  %1216 = vmatpush2.bf16.msra.mxu0 0
  %1217 = vmatprep.subr.bf16.mxu0 0
  %1218 = vmatpush2.bf16.msra.mxu0 0
  %1219 = vmatprep.subr.bf16.mxu0 0
  %1220 = vmatpush2.bf16.msra.mxu0 0
  %1221 = vmatprep.subr.bf16.mxu0 0
  %1222 = vmatpush2.bf16.msra.mxu0 0
  %1223 = vmatprep.subr.bf16.mxu0 0
  %1224 = vmatpush2.bf16.msra.mxu0 0
  %1225 = vmatprep.subr.bf16.mxu0 0
  %1226 = vmatpush2.bf16.msra.mxu0 0
  %1227 = vmatprep.subr.bf16.mxu0 0
  %1228 = vmatpush2.bf16.msra.mxu0 0
  %1229 = vmatprep.subr.bf16.mxu0 0
  %1230 = vmatpush2.bf16.msra.mxu0 0
  %1231 = vmatprep.mubr.bf16.mxu0 0
  %1232 = vmatmul.mubr.bf16.gmra.mxu0 %v1061
  %v1233 = vpop.f32.mrf.mxu0
  %v1234 = vadd.f32 %v1145, %v1233
  %v1235 = vpop.f32.mrf.mxu0
  %v1236 = vpop.f32.mrf.mxu0
  %v1237 = vadd.f32 %v1148, %v1236
  %v1238 = vpop.f32.mrf.mxu0
  %1239 = vdwg.mxu0
  %v1241 = vlaneseq
  %v1242 = vshrl.u32 %v1241, 7
  %v1243 = vsub.s32 0, %v1242
  %v1244 = vrot.slane %v1017, %v1243
  %v1246 = vadd.f32 %v1234, %v1244
  %v1247 = vadd.f32 %v1237, %v1244
  %v1248 = vld [vmem:[%s11] sm:$0xf]
  %v1249 = vld [vmem:[%s11 + $0x4] sm:$0xf]
  %v1250 = vld [vmem:[%s11 + $0x8] sm:$0xf]
  %v1251 = vld [vmem:[%s11 + $0xc] sm:$0xf]
  %v1252 = vld [vmem:[%s11 + $0x10] sm:$0xf]
  %v1253 = vld [vmem:[%s11 + $0x14] sm:$0xf]
  %v1254 = vld [vmem:[%s11 + $0x18] sm:$0xf]
  %v1255 = vld [vmem:[%s11 + $0x1c] sm:$0xf]
  %v1256 = vld [vmem:[%s11 + $0x20] sm:$0xf]
  %v1257 = vld [vmem:[%s11 + $0x24] sm:$0xf]
  %v1258 = vld [vmem:[%s11 + $0x28] sm:$0xf]
  %v1259 = vld [vmem:[%s11 + $0x2c] sm:$0xf]
  %v1260 = vld [vmem:[%s11 + $0x30] sm:$0xf]
  %v1261 = vld [vmem:[%s11 + $0x34] sm:$0xf]
  %v1262 = vld [vmem:[%s11 + $0x38] sm:$0xf]
  %v1263 = vld [vmem:[%s11 + $0x3c] sm:$0xf]
  %v1264 = vpack.c.bf16 %v1247, %v1246
  %v1281 = vunpack.c.l.b16 %v1248
  %v1282 = vunpack.c.l.b16 %v1249
  %v1283 = vunpack.c.l.b16 %v1250
  %v1284 = vunpack.c.l.b16 %v1251
  %v1285 = vunpack.c.l.b16 %v1252
  %v1286 = vunpack.c.l.b16 %v1253
  %v1287 = vunpack.c.l.b16 %v1254
  %v1288 = vunpack.c.l.b16 %v1255
  %v1289 = vunpack.c.l.b16 %v1256
  %v1290 = vunpack.c.l.b16 %v1257
  %v1291 = vunpack.c.l.b16 %v1258
  %v1292 = vunpack.c.l.b16 %v1259
  %v1293 = vunpack.c.l.b16 %v1260
  %v1294 = vunpack.c.l.b16 %v1261
  %v1295 = vunpack.c.l.b16 %v1262
  %v1296 = vunpack.c.l.b16 %v1263
  %v1297 = vpack.c.b16 %v1282, %v1281
  %v1298 = vpack.c.b16 %v1284, %v1283
  %v1299 = vpack.c.b16 %v1286, %v1285
  %v1300 = vpack.c.b16 %v1288, %v1287
  %v1301 = vpack.c.b16 %v1290, %v1289
  %v1302 = vpack.c.b16 %v1292, %v1291
  %v1303 = vpack.c.b16 %v1294, %v1293
  %v1304 = vpack.c.b16 %v1296, %v1295
  %v1306 = vsel %vm181, %v1297, 0
  %v1309 = vsel %vm181, %v1298, 0
  %v1312 = vsel %vm181, %v1299, 0
  %v1315 = vsel %vm181, %v1300, 0
  %v1318 = vsel %vm181, %v1301, 0
  %v1321 = vsel %vm181, %v1302, 0
  %v1324 = vsel %vm181, %v1303, 0
  %v1327 = vsel %vm181, %v1304, 0
  %1329 = vmatprep.subr.bf16.mxu0 0
  %1330 = vmatpush1.bf16.msra.mxu0 0
  %1331 = vmatprep.subr.bf16.mxu0 0
  %1332 = vmatpush1.bf16.msra.mxu0 0
  %1333 = vmatprep.subr.bf16.mxu0 0
  %1334 = vmatpush1.bf16.msra.mxu0 0
  %1335 = vmatprep.subr.bf16.mxu0 0
  %1336 = vmatpush1.bf16.msra.mxu0 0
  %1337 = vmatprep.subr.bf16.mxu0 0
  %1338 = vmatpush1.bf16.msra.mxu0 0
  %1339 = vmatprep.subr.bf16.mxu0 0
  %1340 = vmatpush1.bf16.msra.mxu0 0
  %1341 = vmatprep.subr.bf16.mxu0 0
  %1342 = vmatpush1.bf16.msra.mxu0 0
  %1343 = vmatprep.subr.bf16.mxu0 0
  %1344 = vmatpush1.bf16.msra.mxu0 %v1264
  %1345 = vmatprep.subr.bf16.mxu0 0
  %1346 = vmatpush2.bf16.msra.mxu0 0
  %1347 = vmatprep.subr.bf16.mxu0 0
  %1348 = vmatpush2.bf16.msra.mxu0 0
  %1349 = vmatprep.subr.bf16.mxu0 0
  %1350 = vmatpush2.bf16.msra.mxu0 0
  %1351 = vmatprep.subr.bf16.mxu0 0
  %1352 = vmatpush2.bf16.msra.mxu0 0
  %1353 = vmatprep.subr.bf16.mxu0 0
  %1354 = vmatpush2.bf16.msra.mxu0 0
  %1355 = vmatprep.subr.bf16.mxu0 0
  %1356 = vmatpush2.bf16.msra.mxu0 0
  %1357 = vmatprep.subr.bf16.mxu0 0
  %1358 = vmatpush2.bf16.msra.mxu0 0
  %1359 = vmatprep.subr.bf16.mxu0 0
  %1360 = vmatpush2.bf16.msra.mxu0 0
  %1361 = vmatprep.mubr.bf16.mxu0 0
  %1362 = vmatmul.mubr.bf16.gmra.mxu0 %v1306
  %v1363 = vpop.f32.mrf.mxu0
  %v1364 = vadd.f32 0.0, %v1363
  %v1365 = vpop.f32.mrf.mxu0
  %v1366 = vpop.f32.mrf.mxu0
  %v1367 = vadd.f32 0.0, %v1366
  %v1368 = vpop.f32.mrf.mxu0
  %1369 = vmatprep.mubr.bf16.mxu0 0
  %1370 = vmatmul.mubr.bf16.gmra.mxu0 %v1309
  %v1371 = vpop.f32.mrf.mxu0
  %v1372 = vadd.f32 0.0, %v1371
  %v1373 = vpop.f32.mrf.mxu0
  %v1374 = vpop.f32.mrf.mxu0
  %v1375 = vadd.f32 0.0, %v1374
  %v1376 = vpop.f32.mrf.mxu0
  %1377 = vmatprep.mubr.bf16.mxu0 0
  %1378 = vmatmul.mubr.bf16.gmra.mxu0 %v1312
  %v1379 = vpop.f32.mrf.mxu0
  %v1380 = vadd.f32 0.0, %v1379
  %v1381 = vpop.f32.mrf.mxu0
  %v1382 = vpop.f32.mrf.mxu0
  %v1383 = vadd.f32 0.0, %v1382
  %v1384 = vpop.f32.mrf.mxu0
  %1385 = vmatprep.mubr.bf16.mxu0 0
  %1386 = vmatmul.mubr.bf16.gmra.mxu0 %v1315
  %v1387 = vpop.f32.mrf.mxu0
  %v1388 = vadd.f32 0.0, %v1387
  %v1389 = vpop.f32.mrf.mxu0
  %v1390 = vpop.f32.mrf.mxu0
  %v1391 = vadd.f32 0.0, %v1390
  %v1392 = vpop.f32.mrf.mxu0
  %1393 = vmatprep.mubr.bf16.mxu0 0
  %1394 = vmatmul.mubr.bf16.gmra.mxu0 %v1318
  %v1395 = vpop.f32.mrf.mxu0
  %v1396 = vadd.f32 0.0, %v1395
  %v1397 = vpop.f32.mrf.mxu0
  %v1398 = vpop.f32.mrf.mxu0
  %v1399 = vadd.f32 0.0, %v1398
  %v1400 = vpop.f32.mrf.mxu0
  %1401 = vmatprep.mubr.bf16.mxu0 0
  %1402 = vmatmul.mubr.bf16.gmra.mxu0 %v1321
  %v1403 = vpop.f32.mrf.mxu0
  %v1404 = vadd.f32 0.0, %v1403
  %v1405 = vpop.f32.mrf.mxu0
  %v1406 = vpop.f32.mrf.mxu0
  %v1407 = vadd.f32 0.0, %v1406
  %v1408 = vpop.f32.mrf.mxu0
  %1409 = vmatprep.mubr.bf16.mxu0 0
  %1410 = vmatmul.mubr.bf16.gmra.mxu0 %v1324
  %v1411 = vpop.f32.mrf.mxu0
  %v1412 = vadd.f32 0.0, %v1411
  %v1413 = vpop.f32.mrf.mxu0
  %v1414 = vpop.f32.mrf.mxu0
  %v1415 = vadd.f32 0.0, %v1414
  %v1416 = vpop.f32.mrf.mxu0
  %1417 = vmatprep.mubr.bf16.mxu0 0
  %1418 = vmatmul.mubr.bf16.gmra.mxu0 %v1327
  %v1419 = vpop.f32.mrf.mxu0
  %v1420 = vadd.f32 0.0, %v1419
  %v1421 = vpop.f32.mrf.mxu0
  %v1422 = vpop.f32.mrf.mxu0
  %v1423 = vadd.f32 0.0, %v1422
  %v1424 = vpop.f32.mrf.mxu0
  %1425 = vdwg.mxu0
  %v1426 = vld [vmem:[%s12] sm:$0xf]
  %v1427 = vld [vmem:[%s12 + $0x4] sm:$0xf]
  %v1428 = vld [vmem:[%s12 + $0x8] sm:$0xf]
  %v1429 = vld [vmem:[%s12 + $0xc] sm:$0xf]
  %v1430 = vld [vmem:[%s12 + $0x10] sm:$0xf]
  %v1431 = vld [vmem:[%s12 + $0x14] sm:$0xf]
  %v1432 = vld [vmem:[%s12 + $0x18] sm:$0xf]
  %v1433 = vld [vmem:[%s12 + $0x1c] sm:$0xf]
  %v1434 = vld [vmem:[%s12 + $0x20] sm:$0xf]
  %v1435 = vld [vmem:[%s12 + $0x24] sm:$0xf]
  %v1436 = vld [vmem:[%s12 + $0x28] sm:$0xf]
  %v1437 = vld [vmem:[%s12 + $0x2c] sm:$0xf]
  %v1438 = vld [vmem:[%s12 + $0x30] sm:$0xf]
  %v1439 = vld [vmem:[%s12 + $0x34] sm:$0xf]
  %v1440 = vld [vmem:[%s12 + $0x38] sm:$0xf]
  %v1441 = vld [vmem:[%s12 + $0x3c] sm:$0xf]
  %v1442 = vpack.c.bf16 %v981, %v980
  %v1459 = vunpack.c.l.b16 %v1426
  %v1460 = vunpack.c.l.b16 %v1427
  %v1461 = vunpack.c.l.b16 %v1428
  %v1462 = vunpack.c.l.b16 %v1429
  %v1463 = vunpack.c.l.b16 %v1430
  %v1464 = vunpack.c.l.b16 %v1431
  %v1465 = vunpack.c.l.b16 %v1432
  %v1466 = vunpack.c.l.b16 %v1433
  %v1467 = vunpack.c.l.b16 %v1434
  %v1468 = vunpack.c.l.b16 %v1435
  %v1469 = vunpack.c.l.b16 %v1436
  %v1470 = vunpack.c.l.b16 %v1437
  %v1471 = vunpack.c.l.b16 %v1438
  %v1472 = vunpack.c.l.b16 %v1439
  %v1473 = vunpack.c.l.b16 %v1440
  %v1474 = vunpack.c.l.b16 %v1441
  %v1475 = vpack.c.b16 %v1460, %v1459
  %v1476 = vpack.c.b16 %v1462, %v1461
  %v1477 = vpack.c.b16 %v1464, %v1463
  %v1478 = vpack.c.b16 %v1466, %v1465
  %v1479 = vpack.c.b16 %v1468, %v1467
  %v1480 = vpack.c.b16 %v1470, %v1469
  %v1481 = vpack.c.b16 %v1472, %v1471
  %v1482 = vpack.c.b16 %v1474, %v1473
  %v1484 = vsel %vm181, %v1475, 0
  %v1487 = vsel %vm181, %v1476, 0
  %v1490 = vsel %vm181, %v1477, 0
  %v1493 = vsel %vm181, %v1478, 0
  %v1496 = vsel %vm181, %v1479, 0
  %v1499 = vsel %vm181, %v1480, 0
  %v1502 = vsel %vm181, %v1481, 0
  %v1505 = vsel %vm181, %v1482, 0
  %1507 = vmatprep.subr.bf16.mxu0 0
  %1508 = vmatpush1.bf16.msra.mxu0 0
  %1509 = vmatprep.subr.bf16.mxu0 0
  %1510 = vmatpush1.bf16.msra.mxu0 0
  %1511 = vmatprep.subr.bf16.mxu0 0
  %1512 = vmatpush1.bf16.msra.mxu0 0
  %1513 = vmatprep.subr.bf16.mxu0 0
  %1514 = vmatpush1.bf16.msra.mxu0 0
  %1515 = vmatprep.subr.bf16.mxu0 0
  %1516 = vmatpush1.bf16.msra.mxu0 0
  %1517 = vmatprep.subr.bf16.mxu0 0
  %1518 = vmatpush1.bf16.msra.mxu0 0
  %1519 = vmatprep.subr.bf16.mxu0 0
  %1520 = vmatpush1.bf16.msra.mxu0 0
  %1521 = vmatprep.subr.bf16.mxu0 0
  %1522 = vmatpush1.bf16.msra.mxu0 %v1442
  %1523 = vmatprep.subr.bf16.mxu0 0
  %1524 = vmatpush2.bf16.msra.mxu0 0
  %1525 = vmatprep.subr.bf16.mxu0 0
  %1526 = vmatpush2.bf16.msra.mxu0 0
  %1527 = vmatprep.subr.bf16.mxu0 0
  %1528 = vmatpush2.bf16.msra.mxu0 0
  %1529 = vmatprep.subr.bf16.mxu0 0
  %1530 = vmatpush2.bf16.msra.mxu0 0
  %1531 = vmatprep.subr.bf16.mxu0 0
  %1532 = vmatpush2.bf16.msra.mxu0 0
  %1533 = vmatprep.subr.bf16.mxu0 0
  %1534 = vmatpush2.bf16.msra.mxu0 0
  %1535 = vmatprep.subr.bf16.mxu0 0
  %1536 = vmatpush2.bf16.msra.mxu0 0
  %1537 = vmatprep.subr.bf16.mxu0 0
  %1538 = vmatpush2.bf16.msra.mxu0 0
  %1539 = vmatprep.mubr.bf16.mxu0 0
  %1540 = vmatmul.mubr.bf16.gmra.mxu0 %v1484
  %v1541 = vpop.f32.mrf.mxu0
  %v1542 = vadd.f32 0.0, %v1541
  %v1543 = vpop.f32.mrf.mxu0
  %v1544 = vpop.f32.mrf.mxu0
  %v1545 = vadd.f32 0.0, %v1544
  %v1546 = vpop.f32.mrf.mxu0
  %1547 = vmatprep.mubr.bf16.mxu0 0
  %1548 = vmatmul.mubr.bf16.gmra.mxu0 %v1487
  %v1549 = vpop.f32.mrf.mxu0
  %v1550 = vadd.f32 0.0, %v1549
  %v1551 = vpop.f32.mrf.mxu0
  %v1552 = vpop.f32.mrf.mxu0
  %v1553 = vadd.f32 0.0, %v1552
  %v1554 = vpop.f32.mrf.mxu0
  %1555 = vmatprep.mubr.bf16.mxu0 0
  %1556 = vmatmul.mubr.bf16.gmra.mxu0 %v1490
  %v1557 = vpop.f32.mrf.mxu0
  %v1558 = vadd.f32 0.0, %v1557
  %v1559 = vpop.f32.mrf.mxu0
  %v1560 = vpop.f32.mrf.mxu0
  %v1561 = vadd.f32 0.0, %v1560
  %v1562 = vpop.f32.mrf.mxu0
  %1563 = vmatprep.mubr.bf16.mxu0 0
  %1564 = vmatmul.mubr.bf16.gmra.mxu0 %v1493
  %v1565 = vpop.f32.mrf.mxu0
  %v1566 = vadd.f32 0.0, %v1565
  %v1567 = vpop.f32.mrf.mxu0
  %v1568 = vpop.f32.mrf.mxu0
  %v1569 = vadd.f32 0.0, %v1568
  %v1570 = vpop.f32.mrf.mxu0
  %1571 = vmatprep.mubr.bf16.mxu0 0
  %1572 = vmatmul.mubr.bf16.gmra.mxu0 %v1496
  %v1573 = vpop.f32.mrf.mxu0
  %v1574 = vadd.f32 0.0, %v1573
  %v1575 = vpop.f32.mrf.mxu0
  %v1576 = vpop.f32.mrf.mxu0
  %v1577 = vadd.f32 0.0, %v1576
  %v1578 = vpop.f32.mrf.mxu0
  %1579 = vmatprep.mubr.bf16.mxu0 0
  %1580 = vmatmul.mubr.bf16.gmra.mxu0 %v1499
  %v1581 = vpop.f32.mrf.mxu0
  %v1582 = vadd.f32 0.0, %v1581
  %v1583 = vpop.f32.mrf.mxu0
  %v1584 = vpop.f32.mrf.mxu0
  %v1585 = vadd.f32 0.0, %v1584
  %v1586 = vpop.f32.mrf.mxu0
  %1587 = vmatprep.mubr.bf16.mxu0 0
  %1588 = vmatmul.mubr.bf16.gmra.mxu0 %v1502
  %v1589 = vpop.f32.mrf.mxu0
  %v1590 = vadd.f32 0.0, %v1589
  %v1591 = vpop.f32.mrf.mxu0
  %v1592 = vpop.f32.mrf.mxu0
  %v1593 = vadd.f32 0.0, %v1592
  %v1594 = vpop.f32.mrf.mxu0
  %1595 = vmatprep.mubr.bf16.mxu0 0
  %1596 = vmatmul.mubr.bf16.gmra.mxu0 %v1505
  %v1597 = vpop.f32.mrf.mxu0
  %v1598 = vadd.f32 0.0, %v1597
  %v1599 = vpop.f32.mrf.mxu0
  %v1600 = vpop.f32.mrf.mxu0
  %v1601 = vadd.f32 0.0, %v1600
  %v1602 = vpop.f32.mrf.mxu0
  %1603 = vdwg.mxu0
  %v1604 = vmul.f32 %v1364, %v1542
  %v1605 = vmul.f32 %v1367, %v1545
  %v1606 = vmul.f32 %v1372, %v1550
  %v1607 = vmul.f32 %v1375, %v1553
  %v1608 = vmul.f32 %v1380, %v1558
  %v1609 = vmul.f32 %v1383, %v1561
  %v1610 = vmul.f32 %v1388, %v1566
  %v1611 = vmul.f32 %v1391, %v1569
  %v1612 = vmul.f32 %v1396, %v1574
  %v1613 = vmul.f32 %v1399, %v1577
  %v1614 = vmul.f32 %v1404, %v1582
  %v1615 = vmul.f32 %v1407, %v1585
  %v1616 = vmul.f32 %v1412, %v1590
  %v1617 = vmul.f32 %v1415, %v1593
  %v1618 = vmul.f32 %v1420, %v1598
  %v1619 = vmul.f32 %v1423, %v1601
  %1620 = vadd.xlane.f32.xlu0 %v1604
  %v1621 = vpop.xlane.xlu0 %1620
  %1622 = vadd.xlane.f32.xlu0 %v1605
  %v1623 = vpop.xlane.xlu0 %1622
  %1624 = vadd.xlane.f32.xlu0 %v1606
  %v1625 = vpop.xlane.xlu0 %1624
  %1626 = vadd.xlane.f32.xlu0 %v1607
  %v1627 = vpop.xlane.xlu0 %1626
  %1628 = vadd.xlane.f32.xlu0 %v1608
  %v1629 = vpop.xlane.xlu0 %1628
  %1630 = vadd.xlane.f32.xlu0 %v1609
  %v1631 = vpop.xlane.xlu0 %1630
  %1632 = vadd.xlane.f32.xlu0 %v1610
  %v1633 = vpop.xlane.xlu0 %1632
  %1634 = vadd.xlane.f32.xlu0 %v1611
  %v1635 = vpop.xlane.xlu0 %1634
  %1636 = vadd.xlane.f32.xlu0 %v1612
  %v1637 = vpop.xlane.xlu0 %1636
  %1638 = vadd.xlane.f32.xlu0 %v1613
  %v1639 = vpop.xlane.xlu0 %1638
  %1640 = vadd.xlane.f32.xlu0 %v1614
  %v1641 = vpop.xlane.xlu0 %1640
  %1642 = vadd.xlane.f32.xlu0 %v1615
  %v1643 = vpop.xlane.xlu0 %1642
  %1644 = vadd.xlane.f32.xlu0 %v1616
  %v1645 = vpop.xlane.xlu0 %1644
  %1646 = vadd.xlane.f32.xlu0 %v1617
  %v1647 = vpop.xlane.xlu0 %1646
  %1648 = vadd.xlane.f32.xlu0 %v1618
  %v1649 = vpop.xlane.xlu0 %1648
  %1650 = vadd.xlane.f32.xlu0 %v1619
  %v1651 = vpop.xlane.xlu0 %1650
  %vm1652 = vcmask 7168
  %1653 = vst.msk [vmem:[%s13] sm:$0xff] %vm1652, %v1621
  %1654 = vst.msk [vmem:[%s13 + $0x8] sm:$0xff] %vm1652, %v1623
  %1655 = vst.msk [vmem:[%s13 + $0x10] sm:$0xff] %vm1652, %v1625
  %1656 = vst.msk [vmem:[%s13 + $0x18] sm:$0xff] %vm1652, %v1627
  %1657 = vst.msk [vmem:[%s13 + $0x20] sm:$0xff] %vm1652, %v1629
  %1658 = vst.msk [vmem:[%s13 + $0x28] sm:$0xff] %vm1652, %v1631
  %1659 = vst.msk [vmem:[%s13 + $0x30] sm:$0xff] %vm1652, %v1633
  %1660 = vst.msk [vmem:[%s13 + $0x38] sm:$0xff] %vm1652, %v1635
  %1661 = vst.msk [vmem:[%s13 + $0x40] sm:$0xff] %vm1652, %v1637
  %1662 = vst.msk [vmem:[%s13 + $0x48] sm:$0xff] %vm1652, %v1639
  %1663 = vst.msk [vmem:[%s13 + $0x50] sm:$0xff] %vm1652, %v1641
  %1664 = vst.msk [vmem:[%s13 + $0x58] sm:$0xff] %vm1652, %v1643
  %1665 = vst.msk [vmem:[%s13 + $0x60] sm:$0xff] %vm1652, %v1645
  %1666 = vst.msk [vmem:[%s13 + $0x68] sm:$0xff] %vm1652, %v1647
  %1667 = vst.msk [vmem:[%s13 + $0x70] sm:$0xff] %vm1652, %v1649
  %1668 = vst.msk [vmem:[%s13 + $0x78] sm:$0xff] %vm1652, %v1651
  // Predicated region
  $region54: #{model_forward.1} parent=0 // pred_check
    _
  $region55: #{model_forward.1} parent=0 // pred_check_branch
    %1670 = sbr.rel (0) target = $region57
  $region56: #{model_forward.1} parent=0 // pred_region
    _
  $region57: #{model_forward.1} parent=0 // pred_fallthru
    _
  // Predicated region
  $region58: #{model_forward.1} parent=0 // pred_check
    _
  $region59: #{model_forward.1} parent=0 // pred_check_branch
    %1672 = sbr.rel (0) target = $region61
  $region60: #{model_forward.1} parent=0 // pred_region
    _
  $region61: #{model_forward.1} parent=0 // pred_fallthru
    _

</llo_original>
